<compile_context>
chip_gen: v5e
topology: v5e:2x2
jax: 0.10.0
libtpu: 0.0.40
codegen_flags: <defaults>
</compile_context>

<pallas_src>
import functools

import numpy as np
import jax
import jax.numpy as jnp
from jax import lax
from jax.experimental import pallas as pl
from jax.experimental.pallas import tpu as pltpu

EPS = 1e-5  # nn.BatchNorm2d default eps


# --------------------------------------------------------------------- kernel helpers
def _bn(v, gamma, beta, relu):
    """Training-mode BatchNorm (+ optional ReLU) on a channel-last (rows, C) slab.

    Centered two-pass statistics: per-channel mean/variance are plain column sums
    (no fold matrices, no MXU passes) and the (1, C) scale/shift broadcast naturally.
    """
    inv_n = 1.0 / v.shape[0]
    mean = jnp.sum(v, axis=0, keepdims=True) * inv_n          # (1, C)
    d = v - mean
    var = jnp.sum(d * d, axis=0, keepdims=True) * inv_n       # (1, C), centered
    y = d * (gamma * lax.rsqrt(var + EPS)) + beta
    return jnp.maximum(y, 0.0) if relu else y


def _fold_to_pad(pad_ref, v_cl, N, H, W, C):
    """Write a channel-last slab (rows ordered (w, n, h)) into the halo-padded,
    lane-folded scratch (N, rows, (W+2)*C) with a one-pixel zero halo.

    Only the halo strips are zeroed; the image is stored at row offset 8 (sublane
    aligned) and lane offset C, one W-column at a time (leading-dim reshapes only)."""
    PW = (W + 2) * C
    pad_ref[:, 7:8, 0:PW] = jnp.zeros((N, 1, PW), jnp.float32)               # row -1
    pad_ref[:, H + 8:H + 9, 0:PW] = jnp.zeros((N, 1, PW), jnp.float32)       # row H
    pad_ref[:, 8:H + 8, 0:C] = jnp.zeros((N, H, C), jnp.float32)             # col -1
    pad_ref[:, 8:H + 8, (W + 1) * C:PW] = jnp.zeros((N, H, C), jnp.float32)  # col W
    for w in range(W):
        pad_ref[:, 8:H + 8, (w + 1) * C:(w + 2) * C] = \
            v_cl[w * N * H:(w + 1) * N * H, :].reshape(N, H, C)


def _taps_from_pad(pad_ref, taps, N, W, C, Ho, stride):
    """9-tap 3x3 stencil over the halo-padded scratch.  Returns (N, Ho, W*C):
    sum_k taps[k] * shifted(image), or the unweighted 9-tap sum if taps is None
    (used by the AvgPool shortcut; its 1/9 is applied by the caller)."""
    WC = W * C
    acc = None
    for ky in range(3):
        for kx in range(3):
            if stride == 1:
                patch = pad_ref[:, 7 + ky:7 + ky + Ho, kx * C:kx * C + WC]
            else:
                patch = pad_ref[:, pl.ds(7 + ky, Ho, stride), kx * C:kx * C + WC]
            term = patch if taps is None else patch * taps[ky * 3 + kx]
            acc = term if acc is None else acc + term
    return acc


def _unfold(acc, N, Ho, Wo, C, stride):
    """Lane-folded stencil output (N, Ho, W*C) -> channel-last rows (Wo*N*Ho, C),
    keeping only every `stride`-th W column (the stride-2 column selection)."""
    pieces = [acc[:, :, (stride * wo) * C:(stride * wo + 1) * C].reshape(N * Ho, C)
              for wo in range(Wo)]
    return pieces[0] if len(pieces) == 1 else jnp.concatenate(pieces, axis=0)


# ----------------------------------------------------------------------------- kernel
def _bottleneck_kernel(stride, N, H, W, Cin, Cmid, Cout, cdt,
                       x_ref, w1_ref, g1_ref, b1_ref, w2_ref, g2_ref, b2_ref,
                       w3_ref, g3_ref, b3_ref, out_ref, pad_ref):
    Ho = (H - 1) // stride + 1
    Wo = (W - 1) // stride + 1

    x = x_ref[...]                                           # (W*N*H, Cin), io dtype

    # ---- conv1: grouped 1x1 (+ channel shuffle folded into weight columns / bn1)
    h1 = jnp.dot(x.astype(cdt), w1_ref[...], preferred_element_type=jnp.float32)
    y1 = _bn(h1, g1_ref[...], b1_ref[...], relu=True)        # (W*N*H, Cmid)

    # ---- conv2: 3x3 depthwise, stride `stride`, padding=1 (halo-scratch stencil)
    _fold_to_pad(pad_ref, y1, N, H, W, Cmid)
    w2taps = w2_ref[...]                                     # (9, W*Cmid), loaded once
    acc = _taps_from_pad(pad_ref, w2taps, N, W, Cmid, Ho, stride)
    a2 = _unfold(acc, N, Ho, Wo, Cmid, stride)               # (Wo*N*Ho, Cmid)
    y2 = _bn(a2, g2_ref[...], b2_ref[...], relu=True)

    # ---- conv3: grouped 1x1, channel-last
    h3 = jnp.dot(y2.astype(cdt), w3_ref[...], preferred_element_type=jnp.float32)
    y3 = _bn(h3, g3_ref[...], b3_ref[...], relu=False)       # (Wo*N*Ho, Cout)

    # ---- shortcut + final ReLU
    if stride == 1:
        out = jnp.maximum(y3 + x.astype(jnp.float32), 0.0)   # identity shortcut
    else:
        # AvgPool2d(3, stride=2, padding=1, count_include_pad=True) shortcut,
        # concatenated on the channel (lane) axis.
        _fold_to_pad(pad_ref, x.astype(jnp.float32), N, H, W, Cin)
        sc = _taps_from_pad(pad_ref, None, N, W, Cin, Ho, stride)
        sc = _unfold(sc, N, Ho, Wo, Cin, stride) * (1.0 / 9.0)
        out = jnp.maximum(jnp.concatenate([y3, sc], axis=1), 0.0)

    out_ref[...] = out.astype(out_ref.dtype)                 # single channel-last store


# ----------------------------------------------------------------------------- wrapper
def _full_spec(shape):
    nd = len(shape)
    return pl.BlockSpec(shape, lambda i: (0,) * nd)


def bottleneck_blk(x_nchw, kparams, *, stride, in_chn, out_chn,
                   compute_dtype=jnp.bfloat16):
    N, C, H, W = x_nchw.shape
    assert C == in_chn
    mid = out_chn // 4
    Ho = (H - 1) // stride + 1
    Wo = (W - 1) // stride + 1
    c_total = out_chn + (in_chn if stride == 2 else 0)
    if stride == 1:
        assert in_chn == out_chn, "residual path requires in_chn == out_chn"

    io_dtype = jnp.bfloat16 if compute_dtype == jnp.bfloat16 else jnp.float32

    # NCHW -> channel-last rows ordered (w, n, h); pure XLA layout plumbing.
    xf = jnp.transpose(x_nchw, (3, 0, 2, 1)).reshape(W * N * H, in_chn).astype(io_dtype)

    operands = (xf,) + tuple(kparams)
    scratch_chn = mid if stride == 1 else max(mid, in_chn)
    scratch = [pltpu.VMEM((N, H + 9, (W + 2) * scratch_chn), jnp.float32)]

    kernel = functools.partial(_bottleneck_kernel, stride, N, H, W,
                               in_chn, mid, out_chn, compute_dtype)

    out2d = pl.pallas_call(
        kernel,
        out_shape=jax.ShapeDtypeStruct((Wo * N * Ho, c_total), io_dtype),
        grid=(1,),
        in_specs=[_full_spec(op.shape) for op in operands],
        out_specs=_full_spec((Wo * N * Ho, c_total)),
        scratch_shapes=scratch,
        compiler_params=pltpu.CompilerParams(
            dimension_semantics=("arbitrary",),
            vmem_limit_bytes=32 * 1024 * 1024),
    )(*operands)

    # (Wo*N*Ho, c_total), rows ordered (wo, n, ho) -> NCHW (f32 for the caller/test).
    out = out2d.astype(jnp.float32).reshape(Wo, N, Ho, c_total)
    return jnp.transpose(out, (1, 3, 2, 0))


# ----------------------------------------------------------- parameter construction
def init_params(key, in_chn, out_chn, groups):
    """Deterministic synthetic parameters in PyTorch layouts."""
    mid = out_chn // 4
    g = 1 if in_chn == 24 else groups
    ks = jax.random.split(key, 9)
    return dict(
        w1=0.2 * jax.random.normal(ks[0], (mid, in_chn // g, 1, 1), jnp.float32),
        w2=0.2 * jax.random.normal(ks[1], (mid, 1, 3, 3), jnp.float32),
        w3=0.2 * jax.random.normal(ks[2], (out_chn, mid // groups, 1, 1), jnp.float32),
        g1=1.0 + 0.1 * jax.random.normal(ks[3], (mid,), jnp.float32),
        b1=0.1 * jax.random.normal(ks[4], (mid,), jnp.float32),
        g2=1.0 + 0.1 * jax.random.normal(ks[5], (mid,), jnp.float32),
        b2=0.1 * jax.random.normal(ks[6], (mid,), jnp.float32),
        g3=1.0 + 0.1 * jax.random.normal(ks[7], (out_chn,), jnp.float32),
        b3=0.1 * jax.random.normal(ks[8], (out_chn,), jnp.float32),
    )


def _grouped_1x1_to_dense(w, groups):
    """torch (Cout, Cin//g, 1, 1) grouped 1x1 conv -> dense block-diagonal (Cin, Cout)."""
    w = np.asarray(w, np.float32)
    cout, cin_g = w.shape[0], w.shape[1]
    cout_g = cout // groups
    cin = cin_g * groups
    dense = np.zeros((cin, cout), np.float32)
    w2d = w[:, :, 0, 0]
    for gi in range(groups):
        dense[gi * cin_g:(gi + 1) * cin_g, gi * cout_g:(gi + 1) * cout_g] = \
            w2d[gi * cout_g:(gi + 1) * cout_g, :].T
    return dense


def prep_kernel_params(p, in_chn, out_chn, groups, W, compute_dtype=jnp.bfloat16):
    """Convert torch-layout params into the channel-last layouts the kernel consumes."""
    mid = out_chn // 4
    g_conv1 = 1 if in_chn == 24 else groups

    w1d = _grouped_1x1_to_dense(p['w1'], g_conv1)             # (Cin, mid)
    w3d = _grouped_1x1_to_dense(p['w3'], groups)              # (mid, out_chn)

    # ShuffleUnit permutation folded into conv1 columns and bn1 gamma/beta.
    perm = np.arange(mid).reshape(g_conv1, mid // g_conv1).T.reshape(-1)
    w1d = w1d[:, perm]

    # Depthwise 3x3 weights tiled across the folded W lanes: row k = ky*3 + kx.
    w2 = np.asarray(p['w2'], np.float32)[:, 0]                # (mid, 3, 3)
    w2t = np.tile(np.transpose(w2, (1, 2, 0)).reshape(9, mid), (1, W))   # (9, W*mid)

    return (
        jnp.asarray(w1d, compute_dtype),
        jnp.asarray(np.asarray(p['g1'])[perm].reshape(1, mid), jnp.float32),
        jnp.asarray(np.asarray(p['b1'])[perm].reshape(1, mid), jnp.float32),
        jnp.asarray(w2t, jnp.float32),
        jnp.asarray(np.asarray(p['g2']).reshape(1, mid), jnp.float32),
        jnp.asarray(np.asarray(p['b2']).reshape(1, mid), jnp.float32),
        jnp.asarray(w3d, compute_dtype),
        jnp.asarray(np.asarray(p['g3']).reshape(1, out_chn), jnp.float32),
        jnp.asarray(np.asarray(p['b3']).reshape(1, out_chn), jnp.float32),
    )


# ------------------------------------------------------------- pure-JAX reference
def reference(x, p, stride, groups, in_chn, out_chn):
    mid = out_chn // 4
    g = 1 if in_chn == 24 else groups
    prec = lax.Precision.HIGHEST

    def conv(x, w, s, padding, fgc):
        return lax.conv_general_dilated(
            x, w, (s, s), padding, feature_group_count=fgc,
            dimension_numbers=('NCHW', 'OIHW', 'NCHW'), precision=prec)

    def bn(x, gamma, beta):
        m = jnp.mean(x, axis=(0, 2, 3), keepdims=True)
        v = jnp.mean((x - m) ** 2, axis=(0, 2, 3), keepdims=True)
        return (gamma[None, :, None, None] * (x - m) * lax.rsqrt(v + EPS)
                + beta[None, :, None, None])

    h = jax.nn.relu(bn(conv(x, p['w1'], 1, 'VALID', g), p['g1'], p['b1']))
    N, C, H, W = h.shape
    h = h.reshape(N, g, C // g, H, W).transpose(0, 2, 1, 3, 4).reshape(N, C, H, W)
    h = conv(h, p['w2'], stride, [(1, 1), (1, 1)], mid)
    h = jax.nn.relu(bn(h, p['g2'], p['b2']))
    h = bn(conv(h, p['w3'], 1, 'VALID', groups), p['g3'], p['b3'])
    if stride == 2:
        sc = lax.reduce_window(x, 0.0, lax.add, (1, 1, 3, 3), (1, 1, 2, 2),
                               [(0, 0), (0, 0), (1, 1), (1, 1)]) / 9.0
        return jax.nn.relu(jnp.concatenate([h, sc], axis=1))
    return jax.nn.relu(h + x)


# ------------------------------------------------------------------------------ main
if __name__ == "__main__":
    configs = [
        dict(in_chn=32, out_chn=32, groups=4, stride=1, N=2, H=8, W=8),   # residual path
        dict(in_chn=32, out_chn=64, groups=4, stride=2, N=2, H=8, W=8),   # concat path
    ]
    key = jax.random.PRNGKey(0)
    for cfg in configs:
        key, kx, kp = jax.random.split(key, 3)
        x = jax.random.normal(kx, (cfg['N'], cfg['in_chn'], cfg['H'], cfg['W']),
                              jnp.float32)
        params = init_params(kp, cfg['in_chn'], cfg['out_chn'], cfg['groups'])
        ref = reference(x, params, cfg['stride'], cfg['groups'],
                        cfg['in_chn'], cfg['out_chn'])

        # Exact-arithmetic path (f32 MXU operands + f32 I/O): pins the kernel semantics.
        kp32 = prep_kernel_params(params, cfg['in_chn'], cfg['out_chn'], cfg['groups'],
                                  cfg['W'], jnp.float32)
        out32 = jax.block_until_ready(
            bottleneck_blk(x, kp32, stride=cfg['stride'], in_chn=cfg['in_chn'],
                           out_chn=cfg['out_chn'], compute_dtype=jnp.float32))
        assert out32.shape == ref.shape, (out32.shape, ref.shape)
        np.testing.assert_allclose(np.asarray(out32), np.asarray(ref),
                                   rtol=2e-3, atol=2e-3)

        # Fast path (bf16 MXU operands + bf16 kernel I/O, f32 accumulation).
        # Training-mode BN divides by small per-channel batch stds, which amplifies
        # bf16 rounding, so the elementwise bound is loose while the mean error stays
        # small; exactness of the algorithm is pinned by the f32 check above.
        kpbf = prep_kernel_params(params, cfg['in_chn'], cfg['out_chn'], cfg['groups'],
                                  cfg['W'], jnp.bfloat16)
        outbf = jax.block_until_ready(
            bottleneck_blk(x, kpbf, stride=cfg['stride'], in_chn=cfg['in_chn'],
                           out_chn=cfg['out_chn'], compute_dtype=jnp.bfloat16))
        err = np.abs(np.asarray(outbf) - np.asarray(ref))
        np.testing.assert_allclose(np.asarray(outbf), np.asarray(ref),
                                   rtol=1.5e-1, atol=2e-1)
        assert float(err.mean()) < 4e-2, ("bf16 mean abs error too large",
                                          float(err.mean()))

    print("KERNEL_OK")
</pallas_src>

<mosaic_0001>
module attributes {stable_mosaic.version = 11 : i64} {
  func.func @_bottleneck_kernel(%arg0: i32, %arg1: memref<128x32xf32, #tpu.memory_space<vmem>>, %arg2: memref<32x8xf32, #tpu.memory_space<vmem>>, %arg3: memref<1x8xf32, #tpu.memory_space<vmem>>, %arg4: memref<1x8xf32, #tpu.memory_space<vmem>>, %arg5: memref<9x64xf32, #tpu.memory_space<vmem>>, %arg6: memref<1x8xf32, #tpu.memory_space<vmem>>, %arg7: memref<1x8xf32, #tpu.memory_space<vmem>>, %arg8: memref<8x32xf32, #tpu.memory_space<vmem>>, %arg9: memref<1x32xf32, #tpu.memory_space<vmem>>, %arg10: memref<1x32xf32, #tpu.memory_space<vmem>>, %arg11: memref<128x32xf32, #tpu.memory_space<vmem>>, %arg12: memref<2x17x80xf32, #tpu.memory_space<vmem>>) attributes {dimension_semantics = [#tpu.dimension_semantics<arbitrary>], iteration_bounds = array<i64: 1>, scalar_prefetch = 0 : i64, scratch_operands = 1 : i64, tpu.core_type = #tpu.core_type<tc>, window_params = [{pipeline_mode = #tpu.pipeline_mode<synchronous>, transform_indices = @transform_0, window_bounds = array<i64: 128, 32>}, {pipeline_mode = #tpu.pipeline_mode<synchronous>, transform_indices = @transform_1, window_bounds = array<i64: 32, 8>}, {pipeline_mode = #tpu.pipeline_mode<synchronous>, transform_indices = @transform_2, window_bounds = array<i64: 1, 8>}, {pipeline_mode = #tpu.pipeline_mode<synchronous>, transform_indices = @transform_3, window_bounds = array<i64: 1, 8>}, {pipeline_mode = #tpu.pipeline_mode<synchronous>, transform_indices = @transform_4, window_bounds = array<i64: 9, 64>}, {pipeline_mode = #tpu.pipeline_mode<synchronous>, transform_indices = @transform_5, window_bounds = array<i64: 1, 8>}, {pipeline_mode = #tpu.pipeline_mode<synchronous>, transform_indices = @transform_6, window_bounds = array<i64: 1, 8>}, {pipeline_mode = #tpu.pipeline_mode<synchronous>, transform_indices = @transform_7, window_bounds = array<i64: 8, 32>}, {pipeline_mode = #tpu.pipeline_mode<synchronous>, transform_indices = @transform_8, window_bounds = array<i64: 1, 32>}, {pipeline_mode = #tpu.pipeline_mode<synchronous>, transform_indices = @transform_9, window_bounds = array<i64: 1, 32>}, {pipeline_mode = #tpu.pipeline_mode<synchronous>, transform_indices = @transform_10, window_bounds = array<i64: 128, 32>}]} {
    %c0 = arith.constant 0 : index
    %c0_0 = arith.constant 0 : index
    %0 = vector.load %arg1[%c0, %c0_0] : memref<128x32xf32, #tpu.memory_space<vmem>>, vector<128x32xf32>
    %c0_1 = arith.constant 0 : index
    %c0_2 = arith.constant 0 : index
    %1 = vector.load %arg2[%c0_1, %c0_2] : memref<32x8xf32, #tpu.memory_space<vmem>>, vector<32x8xf32>
    %cst = arith.constant dense<0.000000e+00> : vector<128x8xf32>
    %2 = tpu.matmul %0, %1, %cst {dimension_numbers = #tpu.dot_dimension_numbers<[1], [0], [0], [1], [0, 0, 1, 1], [], []>} : vector<128x32xf32>, vector<32x8xf32>, vector<128x8xf32> -> vector<128x8xf32>
    %c0_3 = arith.constant 0 : index
    %c0_4 = arith.constant 0 : index
    %3 = vector.load %arg3[%c0_3, %c0_4] : memref<1x8xf32, #tpu.memory_space<vmem>>, vector<1x8xf32>
    %c0_5 = arith.constant 0 : index
    %c0_6 = arith.constant 0 : index
    %4 = vector.load %arg4[%c0_5, %c0_6] : memref<1x8xf32, #tpu.memory_space<vmem>>, vector<1x8xf32>
    %cst_7 = arith.constant dense<0.000000e+00> : vector<8xf32>
    %5 = vector.multi_reduction <add>, %2, %cst_7 [0] : vector<128x8xf32> to vector<8xf32>
    %6 = vector.shape_cast %5 : vector<8xf32> to vector<1x8xf32>
    %cst_8 = arith.constant 7.812500e-03 : f32
    %7 = vector.broadcast %cst_8 : f32 to vector<1x8xf32>
    %8 = arith.mulf %6, %7 : vector<1x8xf32>
    %9 = vector.broadcast %8 : vector<1x8xf32> to vector<128x8xf32>
    %10 = arith.subf %2, %9 : vector<128x8xf32>
    %11 = arith.mulf %10, %10 : vector<128x8xf32>
    %cst_9 = arith.constant dense<0.000000e+00> : vector<8xf32>
    %12 = vector.multi_reduction <add>, %11, %cst_9 [0] : vector<128x8xf32> to vector<8xf32>
    %13 = vector.shape_cast %12 : vector<8xf32> to vector<1x8xf32>
    %cst_10 = arith.constant 7.812500e-03 : f32
    %14 = vector.broadcast %cst_10 : f32 to vector<1x8xf32>
    %15 = arith.mulf %13, %14 : vector<1x8xf32>
    %cst_11 = arith.constant 9.99999974E-6 : f32
    %16 = vector.broadcast %cst_11 : f32 to vector<1x8xf32>
    %17 = arith.addf %15, %16 : vector<1x8xf32>
    %18 = math.rsqrt %17 : vector<1x8xf32>
    %19 = arith.mulf %3, %18 : vector<1x8xf32>
    %20 = vector.broadcast %19 : vector<1x8xf32> to vector<128x8xf32>
    %21 = arith.mulf %10, %20 : vector<128x8xf32>
    %22 = vector.broadcast %4 : vector<1x8xf32> to vector<128x8xf32>
    %23 = arith.addf %21, %22 : vector<128x8xf32>
    %cst_12 = arith.constant 0.000000e+00 : f32
    %24 = vector.broadcast %cst_12 : f32 to vector<128x8xf32>
    %25 = arith.maximumf %23, %24 : vector<128x8xf32>
    %cst_13 = arith.constant 0.000000e+00 : f32
    %26 = vector.broadcast %cst_13 : f32 to vector<2x1x80xf32>
    %c0_14 = arith.constant 0 : index
    %c7 = arith.constant 7 : index
    %c0_15 = arith.constant 0 : index
    %27 = vector.load %arg12[%c0_14, %c7, %c0_15] : memref<2x17x80xf32, #tpu.memory_space<vmem>>, vector<2x1x80xf32>
    tpu.vector_store %arg12[%c0_14, %c7, %c0_15], %26 {strides = array<i32>} : memref<2x17x80xf32, #tpu.memory_space<vmem>>, vector<2x1x80xf32>,
    %cst_16 = arith.constant 0.000000e+00 : f32
    %28 = vector.broadcast %cst_16 : f32 to vector<2x1x80xf32>
    %c0_17 = arith.constant 0 : index
    %c16 = arith.constant 16 : index
    %c0_18 = arith.constant 0 : index
    %29 = vector.load %arg12[%c0_17, %c16, %c0_18] : memref<2x17x80xf32, #tpu.memory_space<vmem>>, vector<2x1x80xf32>
    tpu.vector_store %arg12[%c0_17, %c16, %c0_18], %28 {strides = array<i32>} : memref<2x17x80xf32, #tpu.memory_space<vmem>>, vector<2x1x80xf32>,
    %cst_19 = arith.constant 0.000000e+00 : f32
    %30 = vector.broadcast %cst_19 : f32 to vector<2x8x8xf32>
    %c0_20 = arith.constant 0 : index
    %c8 = arith.constant 8 : index
    %c0_21 = arith.constant 0 : index
    %31 = vector.load %arg12[%c0_20, %c8, %c0_21] : memref<2x17x80xf32, #tpu.memory_space<vmem>>, vector<2x8x8xf32>
    tpu.vector_store %arg12[%c0_20, %c8, %c0_21], %30 {strides = array<i32>} : memref<2x17x80xf32, #tpu.memory_space<vmem>>, vector<2x8x8xf32>,
    %cst_22 = arith.constant 0.000000e+00 : f32
    %32 = vector.broadcast %cst_22 : f32 to vector<2x8x8xf32>
    %c0_23 = arith.constant 0 : index
    %c8_24 = arith.constant 8 : index
    %c72 = arith.constant 72 : index
    %33 = vector.load %arg12[%c0_23, %c8_24, %c72] : memref<2x17x80xf32, #tpu.memory_space<vmem>>, vector<2x8x8xf32>
    tpu.vector_store %arg12[%c0_23, %c8_24, %c72], %32 {strides = array<i32>} : memref<2x17x80xf32, #tpu.memory_space<vmem>>, vector<2x8x8xf32>,
    %34 = vector.extract_strided_slice %25 {offsets = [0, 0], sizes = [16, 8], strides = [1, 1]} : vector<128x8xf32> to vector<16x8xf32>
    %35 = vector.shape_cast %34 : vector<16x8xf32> to vector<2x8x8xf32>
    %c0_25 = arith.constant 0 : index
    %c8_26 = arith.constant 8 : index
    %c8_27 = arith.constant 8 : index
    %36 = vector.load %arg12[%c0_25, %c8_26, %c8_27] : memref<2x17x80xf32, #tpu.memory_space<vmem>>, vector<2x8x8xf32>
    tpu.vector_store %arg12[%c0_25, %c8_26, %c8_27], %35 {strides = array<i32>} : memref<2x17x80xf32, #tpu.memory_space<vmem>>, vector<2x8x8xf32>,
    %37 = vector.extract_strided_slice %25 {offsets = [16, 0], sizes = [16, 8], strides = [1, 1]} : vector<128x8xf32> to vector<16x8xf32>
    %38 = vector.shape_cast %37 : vector<16x8xf32> to vector<2x8x8xf32>
    %c0_28 = arith.constant 0 : index
    %c8_29 = arith.constant 8 : index
    %c16_30 = arith.constant 16 : index
    %39 = vector.load %arg12[%c0_28, %c8_29, %c16_30] : memref<2x17x80xf32, #tpu.memory_space<vmem>>, vector<2x8x8xf32>
    tpu.vector_store %arg12[%c0_28, %c8_29, %c16_30], %38 {strides = array<i32>} : memref<2x17x80xf32, #tpu.memory_space<vmem>>, vector<2x8x8xf32>,
    %40 = vector.extract_strided_slice %25 {offsets = [32, 0], sizes = [16, 8], strides = [1, 1]} : vector<128x8xf32> to vector<16x8xf32>
    %41 = vector.shape_cast %40 : vector<16x8xf32> to vector<2x8x8xf32>
    %c0_31 = arith.constant 0 : index
    %c8_32 = arith.constant 8 : index
    %c24 = arith.constant 24 : index
    %42 = vector.load %arg12[%c0_31, %c8_32, %c24] : memref<2x17x80xf32, #tpu.memory_space<vmem>>, vector<2x8x8xf32>
    tpu.vector_store %arg12[%c0_31, %c8_32, %c24], %41 {strides = array<i32>} : memref<2x17x80xf32, #tpu.memory_space<vmem>>, vector<2x8x8xf32>,
    %43 = vector.extract_strided_slice %25 {offsets = [48, 0], sizes = [16, 8], strides = [1, 1]} : vector<128x8xf32> to vector<16x8xf32>
    %44 = vector.shape_cast %43 : vector<16x8xf32> to vector<2x8x8xf32>
    %c0_33 = arith.constant 0 : index
    %c8_34 = arith.constant 8 : index
    %c32 = arith.constant 32 : index
    %45 = vector.load %arg12[%c0_33, %c8_34, %c32] : memref<2x17x80xf32, #tpu.memory_space<vmem>>, vector<2x8x8xf32>
    tpu.vector_store %arg12[%c0_33, %c8_34, %c32], %44 {strides = array<i32>} : memref<2x17x80xf32, #tpu.memory_space<vmem>>, vector<2x8x8xf32>,
    %46 = vector.extract_strided_slice %25 {offsets = [64, 0], sizes = [16, 8], strides = [1, 1]} : vector<128x8xf32> to vector<16x8xf32>
    %47 = vector.shape_cast %46 : vector<16x8xf32> to vector<2x8x8xf32>
    %c0_35 = arith.constant 0 : index
    %c8_36 = arith.constant 8 : index
    %c40 = arith.constant 40 : index
    %48 = vector.load %arg12[%c0_35, %c8_36, %c40] : memref<2x17x80xf32, #tpu.memory_space<vmem>>, vector<2x8x8xf32>
    tpu.vector_store %arg12[%c0_35, %c8_36, %c40], %47 {strides = array<i32>} : memref<2x17x80xf32, #tpu.memory_space<vmem>>, vector<2x8x8xf32>,
    %49 = vector.extract_strided_slice %25 {offsets = [80, 0], sizes = [16, 8], strides = [1, 1]} : vector<128x8xf32> to vector<16x8xf32>
    %50 = vector.shape_cast %49 : vector<16x8xf32> to vector<2x8x8xf32>
    %c0_37 = arith.constant 0 : index
    %c8_38 = arith.constant 8 : index
    %c48 = arith.constant 48 : index
    %51 = vector.load %arg12[%c0_37, %c8_38, %c48] : memref<2x17x80xf32, #tpu.memory_space<vmem>>, vector<2x8x8xf32>
    tpu.vector_store %arg12[%c0_37, %c8_38, %c48], %50 {strides = array<i32>} : memref<2x17x80xf32, #tpu.memory_space<vmem>>, vector<2x8x8xf32>,
    %52 = vector.extract_strided_slice %25 {offsets = [96, 0], sizes = [16, 8], strides = [1, 1]} : vector<128x8xf32> to vector<16x8xf32>
    %53 = vector.shape_cast %52 : vector<16x8xf32> to vector<2x8x8xf32>
    %c0_39 = arith.constant 0 : index
    %c8_40 = arith.constant 8 : index
    %c56 = arith.constant 56 : index
    %54 = vector.load %arg12[%c0_39, %c8_40, %c56] : memref<2x17x80xf32, #tpu.memory_space<vmem>>, vector<2x8x8xf32>
    tpu.vector_store %arg12[%c0_39, %c8_40, %c56], %53 {strides = array<i32>} : memref<2x17x80xf32, #tpu.memory_space<vmem>>, vector<2x8x8xf32>,
    %55 = vector.extract_strided_slice %25 {offsets = [112, 0], sizes = [16, 8], strides = [1, 1]} : vector<128x8xf32> to vector<16x8xf32>
    %56 = vector.shape_cast %55 : vector<16x8xf32> to vector<2x8x8xf32>
    %c0_41 = arith.constant 0 : index
    %c8_42 = arith.constant 8 : index
    %c64 = arith.constant 64 : index
    %57 = vector.load %arg12[%c0_41, %c8_42, %c64] : memref<2x17x80xf32, #tpu.memory_space<vmem>>, vector<2x8x8xf32>
    tpu.vector_store %arg12[%c0_41, %c8_42, %c64], %56 {strides = array<i32>} : memref<2x17x80xf32, #tpu.memory_space<vmem>>, vector<2x8x8xf32>,
    %c0_43 = arith.constant 0 : index
    %c0_44 = arith.constant 0 : index
    %58 = vector.load %arg5[%c0_43, %c0_44] : memref<9x64xf32, #tpu.memory_space<vmem>>, vector<9x64xf32>
    %c0_45 = arith.constant 0 : index
    %c7_46 = arith.constant 7 : index
    %c0_47 = arith.constant 0 : index
    %59 = vector.load %arg12[%c0_45, %c7_46, %c0_47] : memref<2x17x80xf32, #tpu.memory_space<vmem>>, vector<2x8x64xf32>
    %60 = vector.extract_strided_slice %58 {offsets = [0, 0], sizes = [1, 64], strides = [1, 1]} : vector<9x64xf32> to vector<1x64xf32>
    %61 = vector.shape_cast %60 : vector<1x64xf32> to vector<64xf32>
    %62 = vector.shape_cast %61 : vector<64xf32> to vector<1x1x64xf32>
    %63 = vector.broadcast %62 : vector<1x1x64xf32> to vector<2x8x64xf32>
    %64 = arith.mulf %59, %63 : vector<2x8x64xf32>
    %c0_48 = arith.constant 0 : index
    %c7_49 = arith.constant 7 : index
    %c8_50 = arith.constant 8 : index
    %65 = vector.load %arg12[%c0_48, %c7_49, %c8_50] : memref<2x17x80xf32, #tpu.memory_space<vmem>>, vector<2x8x64xf32>
    %66 = vector.extract_strided_slice %58 {offsets = [1, 0], sizes = [1, 64], strides = [1, 1]} : vector<9x64xf32> to vector<1x64xf32>
    %67 = vector.shape_cast %66 : vector<1x64xf32> to vector<64xf32>
    %68 = vector.shape_cast %67 : vector<64xf32> to vector<1x1x64xf32>
    %69 = vector.broadcast %68 : vector<1x1x64xf32> to vector<2x8x64xf32>
    %70 = arith.mulf %65, %69 : vector<2x8x64xf32>
    %71 = arith.addf %64, %70 : vector<2x8x64xf32>
    %c0_51 = arith.constant 0 : index
    %c7_52 = arith.constant 7 : index
    %c16_53 = arith.constant 16 : index
    %72 = vector.load %arg12[%c0_51, %c7_52, %c16_53] : memref<2x17x80xf32, #tpu.memory_space<vmem>>, vector<2x8x64xf32>
    %73 = vector.extract_strided_slice %58 {offsets = [2, 0], sizes = [1, 64], strides = [1, 1]} : vector<9x64xf32> to vector<1x64xf32>
    %74 = vector.shape_cast %73 : vector<1x64xf32> to vector<64xf32>
    %75 = vector.shape_cast %74 : vector<64xf32> to vector<1x1x64xf32>
    %76 = vector.broadcast %75 : vector<1x1x64xf32> to vector<2x8x64xf32>
    %77 = arith.mulf %72, %76 : vector<2x8x64xf32>
    %78 = arith.addf %71, %77 : vector<2x8x64xf32>
    %c0_54 = arith.constant 0 : index
    %c8_55 = arith.constant 8 : index
    %c0_56 = arith.constant 0 : index
    %79 = vector.load %arg12[%c0_54, %c8_55, %c0_56] : memref<2x17x80xf32, #tpu.memory_space<vmem>>, vector<2x8x64xf32>
    %80 = vector.extract_strided_slice %58 {offsets = [3, 0], sizes = [1, 64], strides = [1, 1]} : vector<9x64xf32> to vector<1x64xf32>
    %81 = vector.shape_cast %80 : vector<1x64xf32> to vector<64xf32>
    %82 = vector.shape_cast %81 : vector<64xf32> to vector<1x1x64xf32>
    %83 = vector.broadcast %82 : vector<1x1x64xf32> to vector<2x8x64xf32>
    %84 = arith.mulf %79, %83 : vector<2x8x64xf32>
    %85 = arith.addf %78, %84 : vector<2x8x64xf32>
    %c0_57 = arith.constant 0 : index
    %c8_58 = arith.constant 8 : index
    %c8_59 = arith.constant 8 : index
    %86 = vector.load %arg12[%c0_57, %c8_58, %c8_59] : memref<2x17x80xf32, #tpu.memory_space<vmem>>, vector<2x8x64xf32>
    %87 = vector.extract_strided_slice %58 {offsets = [4, 0], sizes = [1, 64], strides = [1, 1]} : vector<9x64xf32> to vector<1x64xf32>
    %88 = vector.shape_cast %87 : vector<1x64xf32> to vector<64xf32>
    %89 = vector.shape_cast %88 : vector<64xf32> to vector<1x1x64xf32>
    %90 = vector.broadcast %89 : vector<1x1x64xf32> to vector<2x8x64xf32>
    %91 = arith.mulf %86, %90 : vector<2x8x64xf32>
    %92 = arith.addf %85, %91 : vector<2x8x64xf32>
    %c0_60 = arith.constant 0 : index
    %c8_61 = arith.constant 8 : index
    %c16_62 = arith.constant 16 : index
    %93 = vector.load %arg12[%c0_60, %c8_61, %c16_62] : memref<2x17x80xf32, #tpu.memory_space<vmem>>, vector<2x8x64xf32>
    %94 = vector.extract_strided_slice %58 {offsets = [5, 0], sizes = [1, 64], strides = [1, 1]} : vector<9x64xf32> to vector<1x64xf32>
    %95 = vector.shape_cast %94 : vector<1x64xf32> to vector<64xf32>
    %96 = vector.shape_cast %95 : vector<64xf32> to vector<1x1x64xf32>
    %97 = vector.broadcast %96 : vector<1x1x64xf32> to vector<2x8x64xf32>
    %98 = arith.mulf %93, %97 : vector<2x8x64xf32>
    %99 = arith.addf %92, %98 : vector<2x8x64xf32>
    %c0_63 = arith.constant 0 : index
    %c9 = arith.constant 9 : index
    %c0_64 = arith.constant 0 : index
    %100 = vector.load %arg12[%c0_63, %c9, %c0_64] : memref<2x17x80xf32, #tpu.memory_space<vmem>>, vector<2x8x64xf32>
    %101 = vector.extract_strided_slice %58 {offsets = [6, 0], sizes = [1, 64], strides = [1, 1]} : vector<9x64xf32> to vector<1x64xf32>
    %102 = vector.shape_cast %101 : vector<1x64xf32> to vector<64xf32>
    %103 = vector.shape_cast %102 : vector<64xf32> to vector<1x1x64xf32>
    %104 = vector.broadcast %103 : vector<1x1x64xf32> to vector<2x8x64xf32>
    %105 = arith.mulf %100, %104 : vector<2x8x64xf32>
    %106 = arith.addf %99, %105 : vector<2x8x64xf32>
    %c0_65 = arith.constant 0 : index
    %c9_66 = arith.constant 9 : index
    %c8_67 = arith.constant 8 : index
    %107 = vector.load %arg12[%c0_65, %c9_66, %c8_67] : memref<2x17x80xf32, #tpu.memory_space<vmem>>, vector<2x8x64xf32>
    %108 = vector.extract_strided_slice %58 {offsets = [7, 0], sizes = [1, 64], strides = [1, 1]} : vector<9x64xf32> to vector<1x64xf32>
    %109 = vector.shape_cast %108 : vector<1x64xf32> to vector<64xf32>
    %110 = vector.shape_cast %109 : vector<64xf32> to vector<1x1x64xf32>
    %111 = vector.broadcast %110 : vector<1x1x64xf32> to vector<2x8x64xf32>
    %112 = arith.mulf %107, %111 : vector<2x8x64xf32>
    %113 = arith.addf %106, %112 : vector<2x8x64xf32>
    %c0_68 = arith.constant 0 : index
    %c9_69 = arith.constant 9 : index
    %c16_70 = arith.constant 16 : index
    %114 = vector.load %arg12[%c0_68, %c9_69, %c16_70] : memref<2x17x80xf32, #tpu.memory_space<vmem>>, vector<2x8x64xf32>
    %115 = vector.extract_strided_slice %58 {offsets = [8, 0], sizes = [1, 64], strides = [1, 1]} : vector<9x64xf32> to vector<1x64xf32>
    %116 = vector.shape_cast %115 : vector<1x64xf32> to vector<64xf32>
    %117 = vector.shape_cast %116 : vector<64xf32> to vector<1x1x64xf32>
    %118 = vector.broadcast %117 : vector<1x1x64xf32> to vector<2x8x64xf32>
    %119 = arith.mulf %114, %118 : vector<2x8x64xf32>
    %120 = arith.addf %113, %119 : vector<2x8x64xf32>
    %121 = vector.extract_strided_slice %120 {offsets = [0, 0, 0], sizes = [2, 8, 8], strides = [1, 1, 1]} : vector<2x8x64xf32> to vector<2x8x8xf32>
    %122 = vector.shape_cast %121 : vector<2x8x8xf32> to vector<16x8xf32>
    %123 = vector.extract_strided_slice %120 {offsets = [0, 0, 8], sizes = [2, 8, 8], strides = [1, 1, 1]} : vector<2x8x64xf32> to vector<2x8x8xf32>
    %124 = vector.shape_cast %123 : vector<2x8x8xf32> to vector<16x8xf32>
    %125 = vector.extract_strided_slice %120 {offsets = [0, 0, 16], sizes = [2, 8, 8], strides = [1, 1, 1]} : vector<2x8x64xf32> to vector<2x8x8xf32>
    %126 = vector.shape_cast %125 : vector<2x8x8xf32> to vector<16x8xf32>
    %127 = vector.extract_strided_slice %120 {offsets = [0, 0, 24], sizes = [2, 8, 8], strides = [1, 1, 1]} : vector<2x8x64xf32> to vector<2x8x8xf32>
    %128 = vector.shape_cast %127 : vector<2x8x8xf32> to vector<16x8xf32>
    %129 = vector.extract_strided_slice %120 {offsets = [0, 0, 32], sizes = [2, 8, 8], strides = [1, 1, 1]} : vector<2x8x64xf32> to vector<2x8x8xf32>
    %130 = vector.shape_cast %129 : vector<2x8x8xf32> to vector<16x8xf32>
    %131 = vector.extract_strided_slice %120 {offsets = [0, 0, 40], sizes = [2, 8, 8], strides = [1, 1, 1]} : vector<2x8x64xf32> to vector<2x8x8xf32>
    %132 = vector.shape_cast %131 : vector<2x8x8xf32> to vector<16x8xf32>
    %133 = vector.extract_strided_slice %120 {offsets = [0, 0, 48], sizes = [2, 8, 8], strides = [1, 1, 1]} : vector<2x8x64xf32> to vector<2x8x8xf32>
    %134 = vector.shape_cast %133 : vector<2x8x8xf32> to vector<16x8xf32>
    %135 = vector.extract_strided_slice %120 {offsets = [0, 0, 56], sizes = [2, 8, 8], strides = [1, 1, 1]} : vector<2x8x64xf32> to vector<2x8x8xf32>
    %136 = vector.shape_cast %135 : vector<2x8x8xf32> to vector<16x8xf32>
    %137 = tpu.concatenate %122, %124, %126, %128, %130, %132, %134, %136 in 0 : vector<16x8xf32>, vector<16x8xf32>, vector<16x8xf32>, vector<16x8xf32>, vector<16x8xf32>, vector<16x8xf32>, vector<16x8xf32>, vector<16x8xf32> -> vector<128x8xf32>
    %c0_71 = arith.constant 0 : index
    %c0_72 = arith.constant 0 : index
    %138 = vector.load %arg6[%c0_71, %c0_72] : memref<1x8xf32, #tpu.memory_space<vmem>>, vector<1x8xf32>
    %c0_73 = arith.constant 0 : index
    %c0_74 = arith.constant 0 : index
    %139 = vector.load %arg7[%c0_73, %c0_74] : memref<1x8xf32, #tpu.memory_space<vmem>>, vector<1x8xf32>
    %cst_75 = arith.constant dense<0.000000e+00> : vector<8xf32>
    %140 = vector.multi_reduction <add>, %137, %cst_75 [0] : vector<128x8xf32> to vector<8xf32>
    %141 = vector.shape_cast %140 : vector<8xf32> to vector<1x8xf32>
    %cst_76 = arith.constant 7.812500e-03 : f32
    %142 = vector.broadcast %cst_76 : f32 to vector<1x8xf32>
    %143 = arith.mulf %141, %142 : vector<1x8xf32>
    %144 = vector.broadcast %143 : vector<1x8xf32> to vector<128x8xf32>
    %145 = arith.subf %137, %144 : vector<128x8xf32>
    %146 = arith.mulf %145, %145 : vector<128x8xf32>
    %cst_77 = arith.constant dense<0.000000e+00> : vector<8xf32>
    %147 = vector.multi_reduction <add>, %146, %cst_77 [0] : vector<128x8xf32> to vector<8xf32>
    %148 = vector.shape_cast %147 : vector<8xf32> to vector<1x8xf32>
    %cst_78 = arith.constant 7.812500e-03 : f32
    %149 = vector.broadcast %cst_78 : f32 to vector<1x8xf32>
    %150 = arith.mulf %148, %149 : vector<1x8xf32>
    %cst_79 = arith.constant 9.99999974E-6 : f32
    %151 = vector.broadcast %cst_79 : f32 to vector<1x8xf32>
    %152 = arith.addf %150, %151 : vector<1x8xf32>
    %153 = math.rsqrt %152 : vector<1x8xf32>
    %154 = arith.mulf %138, %153 : vector<1x8xf32>
    %155 = vector.broadcast %154 : vector<1x8xf32> to vector<128x8xf32>
    %156 = arith.mulf %145, %155 : vector<128x8xf32>
    %157 = vector.broadcast %139 : vector<1x8xf32> to vector<128x8xf32>
    %158 = arith.addf %156, %157 : vector<128x8xf32>
    %cst_80 = arith.constant 0.000000e+00 : f32
    %159 = vector.broadcast %cst_80 : f32 to vector<128x8xf32>
    %160 = arith.maximumf %158, %159 : vector<128x8xf32>
    %c0_81 = arith.constant 0 : index
    %c0_82 = arith.constant 0 : index
    %161 = vector.load %arg8[%c0_81, %c0_82] : memref<8x32xf32, #tpu.memory_space<vmem>>, vector<8x32xf32>
    %cst_83 = arith.constant dense<0.000000e+00> : vector<128x32xf32>
    %162 = tpu.matmul %160, %161, %cst_83 {dimension_numbers = #tpu.dot_dimension_numbers<[1], [0], [0], [1], [0, 0, 1, 1], [], []>} : vector<128x8xf32>, vector<8x32xf32>, vector<128x32xf32> -> vector<128x32xf32>
    %c0_84 = arith.constant 0 : index
    %c0_85 = arith.constant 0 : index
    %163 = vector.load %arg9[%c0_84, %c0_85] : memref<1x32xf32, #tpu.memory_space<vmem>>, vector<1x32xf32>
    %c0_86 = arith.constant 0 : index
    %c0_87 = arith.constant 0 : index
    %164 = vector.load %arg10[%c0_86, %c0_87] : memref<1x32xf32, #tpu.memory_space<vmem>>, vector<1x32xf32>
    %cst_88 = arith.constant dense<0.000000e+00> : vector<32xf32>
    %165 = vector.multi_reduction <add>, %162, %cst_88 [0] : vector<128x32xf32> to vector<32xf32>
    %166 = vector.shape_cast %165 : vector<32xf32> to vector<1x32xf32>
    %cst_89 = arith.constant 7.812500e-03 : f32
    %167 = vector.broadcast %cst_89 : f32 to vector<1x32xf32>
    %168 = arith.mulf %166, %167 : vector<1x32xf32>
    %169 = vector.broadcast %168 : vector<1x32xf32> to vector<128x32xf32>
    %170 = arith.subf %162, %169 : vector<128x32xf32>
    %171 = arith.mulf %170, %170 : vector<128x32xf32>
    %cst_90 = arith.constant dense<0.000000e+00> : vector<32xf32>
    %172 = vector.multi_reduction <add>, %171, %cst_90 [0] : vector<128x32xf32> to vector<32xf32>
    %173 = vector.shape_cast %172 : vector<32xf32> to vector<1x32xf32>
    %cst_91 = arith.constant 7.812500e-03 : f32
    %174 = vector.broadcast %cst_91 : f32 to vector<1x32xf32>
    %175 = arith.mulf %173, %174 : vector<1x32xf32>
    %cst_92 = arith.constant 9.99999974E-6 : f32
    %176 = vector.broadcast %cst_92 : f32 to vector<1x32xf32>
    %177 = arith.addf %175, %176 : vector<1x32xf32>
    %178 = math.rsqrt %177 : vector<1x32xf32>
    %179 = arith.mulf %163, %178 : vector<1x32xf32>
    %180 = vector.broadcast %179 : vector<1x32xf32> to vector<128x32xf32>
    %181 = arith.mulf %170, %180 : vector<128x32xf32>
    %182 = vector.broadcast %164 : vector<1x32xf32> to vector<128x32xf32>
    %183 = arith.addf %181, %182 : vector<128x32xf32>
    %184 = arith.addf %183, %0 : vector<128x32xf32>
    %cst_93 = arith.constant 0.000000e+00 : f32
    %185 = vector.broadcast %cst_93 : f32 to vector<128x32xf32>
    %186 = arith.maximumf %184, %185 : vector<128x32xf32>
    %c0_94 = arith.constant 0 : index
    %c0_95 = arith.constant 0 : index
    %187 = vector.load %arg11[%c0_94, %c0_95] : memref<128x32xf32, #tpu.memory_space<vmem>>, vector<128x32xf32>
    tpu.vector_store %arg11[%c0_94, %c0_95], %186 {strides = array<i32>} : memref<128x32xf32, #tpu.memory_space<vmem>>, vector<128x32xf32>,
    return
  }
  func.func @transform_0(%arg0: i32) -> (i32, i32) {
    %c0_i32 = arith.constant 0 : i32
    %c0_i32_0 = arith.constant 0 : i32
    %c0_i32_1 = arith.constant 0 : i32
    return %c0_i32, %c0_i32_0 : i32, i32
  }
  func.func @transform_1(%arg0: i32) -> (i32, i32) {
    %c0_i32 = arith.constant 0 : i32
    %c0_i32_0 = arith.constant 0 : i32
    %c0_i32_1 = arith.constant 0 : i32
    return %c0_i32, %c0_i32_0 : i32, i32
  }
  func.func @transform_2(%arg0: i32) -> (i32, i32) {
    %c0_i32 = arith.constant 0 : i32
    %c0_i32_0 = arith.constant 0 : i32
    %c0_i32_1 = arith.constant 0 : i32
    return %c0_i32, %c0_i32_0 : i32, i32
  }
  func.func @transform_3(%arg0: i32) -> (i32, i32) {
    %c0_i32 = arith.constant 0 : i32
    %c0_i32_0 = arith.constant 0 : i32
    %c0_i32_1 = arith.constant 0 : i32
    return %c0_i32, %c0_i32_0 : i32, i32
  }
  func.func @transform_4(%arg0: i32) -> (i32, i32) {
    %c0_i32 = arith.constant 0 : i32
    %c0_i32_0 = arith.constant 0 : i32
    %c0_i32_1 = arith.constant 0 : i32
    return %c0_i32, %c0_i32_0 : i32, i32
  }
  func.func @transform_5(%arg0: i32) -> (i32, i32) {
    %c0_i32 = arith.constant 0 : i32
    %c0_i32_0 = arith.constant 0 : i32
    %c0_i32_1 = arith.constant 0 : i32
    return %c0_i32, %c0_i32_0 : i32, i32
  }
  func.func @transform_6(%arg0: i32) -> (i32, i32) {
    %c0_i32 = arith.constant 0 : i32
    %c0_i32_0 = arith.constant 0 : i32
    %c0_i32_1 = arith.constant 0 : i32
    return %c0_i32, %c0_i32_0 : i32, i32
  }
  func.func @transform_7(%arg0: i32) -> (i32, i32) {
    %c0_i32 = arith.constant 0 : i32
    %c0_i32_0 = arith.constant 0 : i32
    %c0_i32_1 = arith.constant 0 : i32
    return %c0_i32, %c0_i32_0 : i32, i32
  }
  func.func @transform_8(%arg0: i32) -> (i32, i32) {
    %c0_i32 = arith.constant 0 : i32
    %c0_i32_0 = arith.constant 0 : i32
    %c0_i32_1 = arith.constant 0 : i32
    return %c0_i32, %c0_i32_0 : i32, i32
  }
  func.func @transform_9(%arg0: i32) -> (i32, i32) {
    %c0_i32 = arith.constant 0 : i32
    %c0_i32_0 = arith.constant 0 : i32
    %c0_i32_1 = arith.constant 0 : i32
    return %c0_i32, %c0_i32_0 : i32, i32
  }
  func.func @transform_10(%arg0: i32) -> (i32, i32) {
    %c0_i32 = arith.constant 0 : i32
    %c0_i32_0 = arith.constant 0 : i32
    %c0_i32_1 = arith.constant 0 : i32
    return %c0_i32, %c0_i32_0 : i32, i32
  }
}

</mosaic_0001>

<llo_original>
// kernel: tpu_custom_call.1
$region0: #{tpu_custom_call.1}
  #allocation0 [shape = 'u32[]', space=smem, size = 0x4, offset = 0x4, fixed_abs, tag = 'smem constant byte address 0x4 - core index']
  #allocation1 [shape = 'u32[72,128]{1,0:T(1,128)}', space=vmem, size = 0x9000, scoped, tag = 'internal scratch']
  #allocation2 [shape = 'f32[2,17,80]{2,1,0:T(8,128)}', space=vmem, size = 0x6000, scoped, tag = 'scratch operand']
  %s0 = inlined_call_operand.vmem [shape: f32[128,32], index: 0, kind: input, shape index: {}]
  %s1 = inlined_call_operand.vmem [shape: f32[32,8], index: 1, kind: input, shape index: {}]
  %s2 = inlined_call_operand.vmem [shape: f32[1,8], index: 2, kind: input, shape index: {}]
  %s3 = inlined_call_operand.vmem [shape: f32[1,8], index: 3, kind: input, shape index: {}]
  %s4 = inlined_call_operand.vmem [shape: f32[9,64], index: 4, kind: input, shape index: {}]
  %s5 = inlined_call_operand.vmem [shape: f32[1,8], index: 5, kind: input, shape index: {}]
  %s6 = inlined_call_operand.vmem [shape: f32[1,8], index: 6, kind: input, shape index: {}]
  %s7 = inlined_call_operand.vmem [shape: f32[8,32], index: 7, kind: input, shape index: {}]
  %s8 = inlined_call_operand.vmem [shape: f32[1,32], index: 8, kind: input, shape index: {}]
  %s9 = inlined_call_operand.vmem [shape: f32[1,32], index: 9, kind: input, shape index: {}]
  %s10 = inlined_call_operand.vmem [shape: f32[128,32], index: 10, kind: output, shape index: {}]
  %s11 = sld [smem:[#allocation0]]
  $region50: #{tpu_custom_call.1} parent=0
    _
  %s13 = ssub.s32 1, %s11
  %s14 = scalar_select 0, %s13, %s11
  // Predicated region
  $region2: #{tpu_custom_call.1} parent=0 // pred_check
    _
  $region3: #{tpu_custom_call.1} parent=0 // pred_check_branch
    %16 = sbr.rel (0) target = $region5
  $region4: #{tpu_custom_call.1} parent=0 // pred_region
    _
  $region5: #{tpu_custom_call.1} parent=0 // pred_fallthru
    _
  // Predicated region
  $region6: #{tpu_custom_call.1} parent=0 // pred_check
    _
  $region7: #{tpu_custom_call.1} parent=0 // pred_check_branch
    %18 = sbr.rel (0) target = $region9
  $region8: #{tpu_custom_call.1} parent=0 // pred_region
    _
  $region9: #{tpu_custom_call.1} parent=0 // pred_fallthru
    _
  // Predicated region
  $region10: #{tpu_custom_call.1} parent=0 // pred_check
    _
  $region11: #{tpu_custom_call.1} parent=0 // pred_check_branch
    %20 = sbr.rel (0) target = $region13
  $region12: #{tpu_custom_call.1} parent=0 // pred_region
    _
  $region13: #{tpu_custom_call.1} parent=0 // pred_fallthru
    _
  // Predicated region
  $region14: #{tpu_custom_call.1} parent=0 // pred_check
    _
  $region15: #{tpu_custom_call.1} parent=0 // pred_check_branch
    %22 = sbr.rel (0) target = $region17
  $region16: #{tpu_custom_call.1} parent=0 // pred_region
    _
  $region17: #{tpu_custom_call.1} parent=0 // pred_fallthru
    _
  // Predicated region
  $region18: #{tpu_custom_call.1} parent=0 // pred_check
    _
  $region19: #{tpu_custom_call.1} parent=0 // pred_check_branch
    %24 = sbr.rel (0) target = $region21
  $region20: #{tpu_custom_call.1} parent=0 // pred_region
    _
  $region21: #{tpu_custom_call.1} parent=0 // pred_fallthru
    _
  // Predicated region
  $region22: #{tpu_custom_call.1} parent=0 // pred_check
    _
  $region23: #{tpu_custom_call.1} parent=0 // pred_check_branch
    %26 = sbr.rel (0) target = $region25
  $region24: #{tpu_custom_call.1} parent=0 // pred_region
    _
  $region25: #{tpu_custom_call.1} parent=0 // pred_fallthru
    _
  // Predicated region
  $region26: #{tpu_custom_call.1} parent=0 // pred_check
    _
  $region27: #{tpu_custom_call.1} parent=0 // pred_check_branch
    %28 = sbr.rel (0) target = $region29
  $region28: #{tpu_custom_call.1} parent=0 // pred_region
    _
  $region29: #{tpu_custom_call.1} parent=0 // pred_fallthru
    _
  // Predicated region
  $region30: #{tpu_custom_call.1} parent=0 // pred_check
    _
  $region31: #{tpu_custom_call.1} parent=0 // pred_check_branch
    %30 = sbr.rel (0) target = $region33
  $region32: #{tpu_custom_call.1} parent=0 // pred_region
    _
  $region33: #{tpu_custom_call.1} parent=0 // pred_fallthru
    _
  // Predicated region
  $region34: #{tpu_custom_call.1} parent=0 // pred_check
    _
  $region35: #{tpu_custom_call.1} parent=0 // pred_check_branch
    %32 = sbr.rel (0) target = $region37
  $region36: #{tpu_custom_call.1} parent=0 // pred_region
    _
  $region37: #{tpu_custom_call.1} parent=0 // pred_fallthru
    _
  // Predicated region
  $region38: #{tpu_custom_call.1} parent=0 // pred_check
    _
  $region39: #{tpu_custom_call.1} parent=0 // pred_check_branch
    %34 = sbr.rel (0) target = $region41
  $region40: #{tpu_custom_call.1} parent=0 // pred_region
    _
  $region41: #{tpu_custom_call.1} parent=0 // pred_fallthru
    _
  %v35 = vld [vmem:[%s0] sm:$0xff]
  %v36 = vld [vmem:[%s0 + $0x8] sm:$0xff]
  %v37 = vld [vmem:[%s0 + $0x10] sm:$0xff]
  %v38 = vld [vmem:[%s0 + $0x18] sm:$0xff]
  %v39 = vld [vmem:[%s0 + $0x20] sm:$0xff]
  %v40 = vld [vmem:[%s0 + $0x28] sm:$0xff]
  %v41 = vld [vmem:[%s0 + $0x30] sm:$0xff]
  %v42 = vld [vmem:[%s0 + $0x38] sm:$0xff]
  %v43 = vld [vmem:[%s0 + $0x40] sm:$0xff]
  %v44 = vld [vmem:[%s0 + $0x48] sm:$0xff]
  %v45 = vld [vmem:[%s0 + $0x50] sm:$0xff]
  %v46 = vld [vmem:[%s0 + $0x58] sm:$0xff]
  %v47 = vld [vmem:[%s0 + $0x60] sm:$0xff]
  %v48 = vld [vmem:[%s0 + $0x68] sm:$0xff]
  %v49 = vld [vmem:[%s0 + $0x70] sm:$0xff]
  %v50 = vld [vmem:[%s0 + $0x78] sm:$0xff]
  %v51 = vld [vmem:[%s1] sm:$0xff]
  %v52 = vld [vmem:[%s1 + $0x8] sm:$0xff]
  %v53 = vld [vmem:[%s1 + $0x10] sm:$0xff]
  %v54 = vld [vmem:[%s1 + $0x18] sm:$0xff]
  %vm55 = vcmask 261120
  %v57 = vsel %vm55, %v35, 0
  %v60 = vsel %vm55, %v36, 0
  %v63 = vsel %vm55, %v37, 0
  %v66 = vsel %vm55, %v38, 0
  %v69 = vsel %vm55, %v39, 0
  %v72 = vsel %vm55, %v40, 0
  %v75 = vsel %vm55, %v41, 0
  %v78 = vsel %vm55, %v42, 0
  %v81 = vsel %vm55, %v43, 0
  %v84 = vsel %vm55, %v44, 0
  %v87 = vsel %vm55, %v45, 0
  %v90 = vsel %vm55, %v46, 0
  %v93 = vsel %vm55, %v47, 0
  %v96 = vsel %vm55, %v48, 0
  %v99 = vsel %vm55, %v49, 0
  %v102 = vsel %vm55, %v50, 0
  %104 = vmatpush.msra.mxu0 0.0
  %105 = vmatpush.msra.mxu0 0.0
  %106 = vmatpush.msra.mxu0 0.0
  %107 = vmatpush.msra.mxu0 0.0
  %108 = vmatpush.msra.mxu0 0.0
  %109 = vmatpush.msra.mxu0 0.0
  %110 = vmatpush.msra.mxu0 0.0
  %111 = vmatpush.msra.mxu0 0.0
  %112 = vmatpush.msra.mxu0 0.0
  %113 = vmatpush.msra.mxu0 0.0
  %114 = vmatpush.msra.mxu0 0.0
  %115 = vmatpush.msra.mxu0 0.0
  %116 = vmatpush.msra.mxu0 %v54
  %117 = vmatpush.msra.mxu0 %v53
  %118 = vmatpush.msra.mxu0 %v52
  %119 = vmatpush.msra.mxu0 %v51
  %120 = vmatmul.f32.gmra.mxu0 %v57
  %v121 = vpop.f32.mrf.mxu0
  %v122 = vadd.f32 0.0, %v121
  %123 = vmatmul.f32.gmra.mxu0 %v60
  %v124 = vpop.f32.mrf.mxu0
  %v125 = vadd.f32 0.0, %v124
  %126 = vmatmul.f32.gmra.mxu0 %v63
  %v127 = vpop.f32.mrf.mxu0
  %v128 = vadd.f32 0.0, %v127
  %129 = vmatmul.f32.gmra.mxu0 %v66
  %v130 = vpop.f32.mrf.mxu0
  %v131 = vadd.f32 0.0, %v130
  %132 = vmatmul.f32.gmra.mxu0 %v69
  %v133 = vpop.f32.mrf.mxu0
  %v134 = vadd.f32 0.0, %v133
  %135 = vmatmul.f32.gmra.mxu0 %v72
  %v136 = vpop.f32.mrf.mxu0
  %v137 = vadd.f32 0.0, %v136
  %138 = vmatmul.f32.gmra.mxu0 %v75
  %v139 = vpop.f32.mrf.mxu0
  %v140 = vadd.f32 0.0, %v139
  %141 = vmatmul.f32.gmra.mxu0 %v78
  %v142 = vpop.f32.mrf.mxu0
  %v143 = vadd.f32 0.0, %v142
  %144 = vmatmul.f32.gmra.mxu0 %v81
  %v145 = vpop.f32.mrf.mxu0
  %v146 = vadd.f32 0.0, %v145
  %147 = vmatmul.f32.gmra.mxu0 %v84
  %v148 = vpop.f32.mrf.mxu0
  %v149 = vadd.f32 0.0, %v148
  %150 = vmatmul.f32.gmra.mxu0 %v87
  %v151 = vpop.f32.mrf.mxu0
  %v152 = vadd.f32 0.0, %v151
  %153 = vmatmul.f32.gmra.mxu0 %v90
  %v154 = vpop.f32.mrf.mxu0
  %v155 = vadd.f32 0.0, %v154
  %156 = vmatmul.f32.gmra.mxu0 %v93
  %v157 = vpop.f32.mrf.mxu0
  %v158 = vadd.f32 0.0, %v157
  %159 = vmatmul.f32.gmra.mxu0 %v96
  %v160 = vpop.f32.mrf.mxu0
  %v161 = vadd.f32 0.0, %v160
  %162 = vmatmul.f32.gmra.mxu0 %v99
  %v163 = vpop.f32.mrf.mxu0
  %v164 = vadd.f32 0.0, %v163
  %165 = vmatmul.f32.gmra.mxu0 %v102
  %v166 = vpop.f32.mrf.mxu0
  %v167 = vadd.f32 0.0, %v166
  %168 = vdwg.mxu0
  %v169 = vld [vmem:[%s2] sm:$0x1]
  %v170 = vld [vmem:[%s3] sm:$0x1]
  %vm171 = vcmask 64512
  %v172 = vsel %vm171, %v122, 0.0
  %v173 = vsel %vm171, %v125, 0.0
  %v174 = vadd.f32 %v172, %v173
  %v175 = vsel %vm171, %v128, 0.0
  %v176 = vadd.f32 %v174, %v175
  %v177 = vsel %vm171, %v131, 0.0
  %v178 = vadd.f32 %v176, %v177
  %v179 = vsel %vm171, %v134, 0.0
  %v180 = vadd.f32 %v178, %v179
  %v181 = vsel %vm171, %v137, 0.0
  %v182 = vadd.f32 %v180, %v181
  %v183 = vsel %vm171, %v140, 0.0
  %v184 = vadd.f32 %v182, %v183
  %v185 = vsel %vm171, %v143, 0.0
  %v186 = vadd.f32 %v184, %v185
  %v187 = vsel %vm171, %v146, 0.0
  %v188 = vadd.f32 %v186, %v187
  %v189 = vsel %vm171, %v149, 0.0
  %v190 = vadd.f32 %v188, %v189
  %v191 = vsel %vm171, %v152, 0.0
  %v192 = vadd.f32 %v190, %v191
  %v193 = vsel %vm171, %v155, 0.0
  %v194 = vadd.f32 %v192, %v193
  %v195 = vsel %vm171, %v158, 0.0
  %v196 = vadd.f32 %v194, %v195
  %v197 = vsel %vm171, %v161, 0.0
  %v198 = vadd.f32 %v196, %v197
  %v199 = vsel %vm171, %v164, 0.0
  %v200 = vadd.f32 %v198, %v199
  %v201 = vsel %vm171, %v167, 0.0
  %v202 = vadd.f32 %v200, %v201
  %v203 = vrot.slane %v202, 4
  %v204 = vadd.f32 %v202, %v203
  %v205 = vrot.slane %v204, 2
  %v206 = vadd.f32 %v204, %v205
  %v207 = vrot.slane %v206, 1
  %v208 = vadd.f32 %v206, %v207
  %v209 = vmul.f32 %v208, 0.0078125
  %v210 = vsub.f32 %v122, %v209
  %v211 = vsub.f32 %v125, %v209
  %v212 = vsub.f32 %v128, %v209
  %v213 = vsub.f32 %v131, %v209
  %v214 = vsub.f32 %v134, %v209
  %v215 = vsub.f32 %v137, %v209
  %v216 = vsub.f32 %v140, %v209
  %v217 = vsub.f32 %v143, %v209
  %v218 = vsub.f32 %v146, %v209
  %v219 = vsub.f32 %v149, %v209
  %v220 = vsub.f32 %v152, %v209
  %v221 = vsub.f32 %v155, %v209
  %v222 = vsub.f32 %v158, %v209
  %v223 = vsub.f32 %v161, %v209
  %v224 = vsub.f32 %v164, %v209
  %v225 = vsub.f32 %v167, %v209
  %v226 = vmul.f32 %v210, %v210
  %v227 = vmul.f32 %v211, %v211
  %v228 = vmul.f32 %v212, %v212
  %v229 = vmul.f32 %v213, %v213
  %v230 = vmul.f32 %v214, %v214
  %v231 = vmul.f32 %v215, %v215
  %v232 = vmul.f32 %v216, %v216
  %v233 = vmul.f32 %v217, %v217
  %v234 = vmul.f32 %v218, %v218
  %v235 = vmul.f32 %v219, %v219
  %v236 = vmul.f32 %v220, %v220
  %v237 = vmul.f32 %v221, %v221
  %v238 = vmul.f32 %v222, %v222
  %v239 = vmul.f32 %v223, %v223
  %v240 = vmul.f32 %v224, %v224
  %v241 = vmul.f32 %v225, %v225
  %v242 = vsel %vm171, %v226, 0.0
  %v243 = vsel %vm171, %v227, 0.0
  %v244 = vadd.f32 %v242, %v243
  %v245 = vsel %vm171, %v228, 0.0
  %v246 = vadd.f32 %v244, %v245
  %v247 = vsel %vm171, %v229, 0.0
  %v248 = vadd.f32 %v246, %v247
  %v249 = vsel %vm171, %v230, 0.0
  %v250 = vadd.f32 %v248, %v249
  %v251 = vsel %vm171, %v231, 0.0
  %v252 = vadd.f32 %v250, %v251
  %v253 = vsel %vm171, %v232, 0.0
  %v254 = vadd.f32 %v252, %v253
  %v255 = vsel %vm171, %v233, 0.0
  %v256 = vadd.f32 %v254, %v255
  %v257 = vsel %vm171, %v234, 0.0
  %v258 = vadd.f32 %v256, %v257
  %v259 = vsel %vm171, %v235, 0.0
  %v260 = vadd.f32 %v258, %v259
  %v261 = vsel %vm171, %v236, 0.0
  %v262 = vadd.f32 %v260, %v261
  %v263 = vsel %vm171, %v237, 0.0
  %v264 = vadd.f32 %v262, %v263
  %v265 = vsel %vm171, %v238, 0.0
  %v266 = vadd.f32 %v264, %v265
  %v267 = vsel %vm171, %v239, 0.0
  %v268 = vadd.f32 %v266, %v267
  %v269 = vsel %vm171, %v240, 0.0
  %v270 = vadd.f32 %v268, %v269
  %v271 = vsel %vm171, %v241, 0.0
  %v272 = vadd.f32 %v270, %v271
  %v273 = vrot.slane %v272, 4
  %v274 = vadd.f32 %v272, %v273
  %v275 = vrot.slane %v274, 2
  %v276 = vadd.f32 %v274, %v275
  %v277 = vrot.slane %v276, 1
  %v278 = vadd.f32 %v276, %v277
  %v279 = vmul.f32 %v278, 0.0078125
  %v280 = vadd.f32 %v279, 1e-05
  %v281 = vrsqrt.pop %v280
  %v282 = vmul.f32 %v281, %v280
  %v283 = vmul.f32 %v282, %v281
  %v284 = vmul.f32 0.5, %v283
  %v285 = vsub.f32 1.5, %v284
  %v286 = vmul.f32 %v281, %v285
  %vm287 = vweird.f32 %v280
  %vm288 = vweird.f32 %v281
  %vm289 = vmor %vm287, %vm288
  %v290 = vsel %vm289, %v281, %v286
  %v291 = vmul.f32 %v169, %v290
  %v293 = vperm.slane %v291, 0
  %v295 = vmul.f32 %v210, %v293
  %v296 = vmul.f32 %v211, %v293
  %v297 = vmul.f32 %v212, %v293
  %v298 = vmul.f32 %v213, %v293
  %v299 = vmul.f32 %v214, %v293
  %v300 = vmul.f32 %v215, %v293
  %v301 = vmul.f32 %v216, %v293
  %v302 = vmul.f32 %v217, %v293
  %v303 = vmul.f32 %v218, %v293
  %v304 = vmul.f32 %v219, %v293
  %v305 = vmul.f32 %v220, %v293
  %v306 = vmul.f32 %v221, %v293
  %v307 = vmul.f32 %v222, %v293
  %v308 = vmul.f32 %v223, %v293
  %v309 = vmul.f32 %v224, %v293
  %v310 = vmul.f32 %v225, %v293
  %v312 = vperm.slane %v170, 0
  %v314 = vadd.f32 %v295, %v312
  %v315 = vadd.f32 %v296, %v312
  %v316 = vadd.f32 %v297, %v312
  %v317 = vadd.f32 %v298, %v312
  %v318 = vadd.f32 %v299, %v312
  %v319 = vadd.f32 %v300, %v312
  %v320 = vadd.f32 %v301, %v312
  %v321 = vadd.f32 %v302, %v312
  %v322 = vadd.f32 %v303, %v312
  %v323 = vadd.f32 %v304, %v312
  %v324 = vadd.f32 %v305, %v312
  %v325 = vadd.f32 %v306, %v312
  %v326 = vadd.f32 %v307, %v312
  %v327 = vadd.f32 %v308, %v312
  %v328 = vadd.f32 %v309, %v312
  %v329 = vadd.f32 %v310, %v312
  %v330 = vmax.f32 %v314, 0.0
  %v331 = vmax.f32 %v315, 0.0
  %v332 = vmax.f32 %v316, 0.0
  %v333 = vmax.f32 %v317, 0.0
  %v334 = vmax.f32 %v318, 0.0
  %v335 = vmax.f32 %v319, 0.0
  %v336 = vmax.f32 %v320, 0.0
  %v337 = vmax.f32 %v321, 0.0
  %v338 = vmax.f32 %v322, 0.0
  %v339 = vmax.f32 %v323, 0.0
  %v340 = vmax.f32 %v324, 0.0
  %v341 = vmax.f32 %v325, 0.0
  %v342 = vmax.f32 %v326, 0.0
  %v343 = vmax.f32 %v327, 0.0
  %v344 = vmax.f32 %v328, 0.0
  %v345 = vmax.f32 %v329, 0.0
  %vm346 = vcmask 647168
  %347 = vst.msk [vmem:[#allocation2 + $0x7] sm:$0x1] %vm346, 0.0
  %348 = vst.msk [vmem:[#allocation2 + $0x1f] sm:$0x1] %vm346, 0.0
  %349 = vst.msk [vmem:[#allocation2 + $0x10] sm:$0x1] %vm346, 0.0
  %350 = vst.msk [vmem:[#allocation2 + $0x28] sm:$0x1] %vm346, 0.0
  %351 = vst.msk [vmem:[#allocation2 + $0x8] sm:$0xff] %vm171, 0.0
  %352 = vst.msk [vmem:[#allocation2 + $0x20] sm:$0xff] %vm171, 0.0
  %vm353 = vcmask 654912
  %354 = vst.msk [vmem:[#allocation2 + $0x8] sm:$0xff] %vm353, 0.0
  %355 = vst.msk [vmem:[#allocation2 + $0x20] sm:$0xff] %vm353, 0.0
  %358 = vrot.lane.b32.xlu0 %v330, 8
  %v359 = vpop.permute.xlu0 %358
  %360 = vrot.lane.b32.xlu0 %v331, 8
  %v361 = vpop.permute.xlu0 %360
  %vm364 = vcmask 130112
  %365 = vst.msk [vmem:[#allocation2 + $0x8] sm:$0xff] %vm364, %v359
  %366 = vst.msk [vmem:[#allocation2 + $0x20] sm:$0xff] %vm364, %v361
  %369 = vrot.lane.b32.xlu0 %v332, 16
  %v370 = vpop.permute.xlu0 %369
  %371 = vrot.lane.b32.xlu0 %v333, 16
  %v372 = vpop.permute.xlu0 %371
  %vm375 = vcmask 195712
  %376 = vst.msk [vmem:[#allocation2 + $0x8] sm:$0xff] %vm375, %v370
  %377 = vst.msk [vmem:[#allocation2 + $0x20] sm:$0xff] %vm375, %v372
  %380 = vrot.lane.b32.xlu0 %v334, 24
  %v381 = vpop.permute.xlu0 %380
  %382 = vrot.lane.b32.xlu0 %v335, 24
  %v383 = vpop.permute.xlu0 %382
  %vm386 = vcmask 261312
  %387 = vst.msk [vmem:[#allocation2 + $0x8] sm:$0xff] %vm386, %v381
  %388 = vst.msk [vmem:[#allocation2 + $0x20] sm:$0xff] %vm386, %v383
  %391 = vrot.lane.b32.xlu0 %v336, 32
  %v392 = vpop.permute.xlu0 %391
  %393 = vrot.lane.b32.xlu0 %v337, 32
  %v394 = vpop.permute.xlu0 %393
  %vm397 = vcmask 326912
  %398 = vst.msk [vmem:[#allocation2 + $0x8] sm:$0xff] %vm397, %v392
  %399 = vst.msk [vmem:[#allocation2 + $0x20] sm:$0xff] %vm397, %v394
  %402 = vrot.lane.b32.xlu0 %v338, 40
  %v403 = vpop.permute.xlu0 %402
  %404 = vrot.lane.b32.xlu0 %v339, 40
  %v405 = vpop.permute.xlu0 %404
  %vm408 = vcmask 392512
  %409 = vst.msk [vmem:[#allocation2 + $0x8] sm:$0xff] %vm408, %v403
  %410 = vst.msk [vmem:[#allocation2 + $0x20] sm:$0xff] %vm408, %v405
  %413 = vrot.lane.b32.xlu0 %v340, 48
  %v414 = vpop.permute.xlu0 %413
  %415 = vrot.lane.b32.xlu0 %v341, 48
  %v416 = vpop.permute.xlu0 %415
  %vm419 = vcmask 458112
  %420 = vst.msk [vmem:[#allocation2 + $0x8] sm:$0xff] %vm419, %v414
  %421 = vst.msk [vmem:[#allocation2 + $0x20] sm:$0xff] %vm419, %v416
  %424 = vrot.lane.b32.xlu0 %v342, 56
  %v425 = vpop.permute.xlu0 %424
  %426 = vrot.lane.b32.xlu0 %v343, 56
  %v427 = vpop.permute.xlu0 %426
  %vm430 = vcmask 523712
  %431 = vst.msk [vmem:[#allocation2 + $0x8] sm:$0xff] %vm430, %v425
  %432 = vst.msk [vmem:[#allocation2 + $0x20] sm:$0xff] %vm430, %v427
  %435 = vrot.lane.b32.xlu0 %v344, 64
  %v436 = vpop.permute.xlu0 %435
  %437 = vrot.lane.b32.xlu0 %v345, 64
  %v438 = vpop.permute.xlu0 %437
  %vm441 = vcmask 589312
  %442 = vst.msk [vmem:[#allocation2 + $0x8] sm:$0xff] %vm441, %v436
  %443 = vst.msk [vmem:[#allocation2 + $0x20] sm:$0xff] %vm441, %v438
  %v444 = vld [vmem:[%s4] sm:$0xff]
  %v445 = vld [vmem:[%s4 + $0x8] sm:$0x1]
  %v446 = vld [vmem:[#allocation2 + $0x7] sm:$0xff]
  %v447 = vld [vmem:[#allocation2 + $0x1f] sm:$0xff]
  %v448 = vperm.slane %v444, 0
  %v449 = vmul.f32 %v446, %v448
  %v450 = vmul.f32 %v447, %v448
  %v451 = vperm.slane %v444, 1
  %453 = vrot.lane.b32.xlu0 %v451, 8
  %v454 = vpop.permute.xlu0 %453
  %v456 = vmul.f32 %v446, %v454
  %v457 = vmul.f32 %v447, %v454
  %460 = vrot.lane.b32.xlu0 %v456, 120
  %v461 = vpop.permute.xlu0 %460
  %462 = vrot.lane.b32.xlu0 %v457, 120
  %v463 = vpop.permute.xlu0 %462
  %v466 = vadd.f32 %v449, %v461
  %v467 = vadd.f32 %v450, %v463
  %v468 = vperm.slane %v444, 2
  %470 = vrot.lane.b32.xlu0 %v468, 16
  %v471 = vpop.permute.xlu0 %470
  %v473 = vmul.f32 %v446, %v471
  %v474 = vmul.f32 %v447, %v471
  %477 = vrot.lane.b32.xlu0 %v473, 112
  %v478 = vpop.permute.xlu0 %477
  %479 = vrot.lane.b32.xlu0 %v474, 112
  %v480 = vpop.permute.xlu0 %479
  %v483 = vadd.f32 %v466, %v478
  %v484 = vadd.f32 %v467, %v480
  %v485 = vld [vmem:[#allocation2 + $0x8] sm:$0xff]
  %v486 = vld [vmem:[#allocation2 + $0x20] sm:$0xff]
  %v487 = vperm.slane %v444, 3
  %v488 = vmul.f32 %v485, %v487
  %v489 = vmul.f32 %v486, %v487
  %v490 = vadd.f32 %v483, %v488
  %v491 = vadd.f32 %v484, %v489
  %v492 = vperm.slane %v444, 4
  %494 = vrot.lane.b32.xlu0 %v492, 8
  %v495 = vpop.permute.xlu0 %494
  %v497 = vmul.f32 %v485, %v495
  %v498 = vmul.f32 %v486, %v495
  %501 = vrot.lane.b32.xlu0 %v497, 120
  %v502 = vpop.permute.xlu0 %501
  %503 = vrot.lane.b32.xlu0 %v498, 120
  %v504 = vpop.permute.xlu0 %503
  %v507 = vadd.f32 %v490, %v502
  %v508 = vadd.f32 %v491, %v504
  %v509 = vperm.slane %v444, 5
  %511 = vrot.lane.b32.xlu0 %v509, 16
  %v512 = vpop.permute.xlu0 %511
  %v514 = vmul.f32 %v485, %v512
  %v515 = vmul.f32 %v486, %v512
  %518 = vrot.lane.b32.xlu0 %v514, 112
  %v519 = vpop.permute.xlu0 %518
  %520 = vrot.lane.b32.xlu0 %v515, 112
  %v521 = vpop.permute.xlu0 %520
  %v524 = vadd.f32 %v507, %v519
  %v525 = vadd.f32 %v508, %v521
  %v526 = vld [vmem:[#allocation2 + $0x9] sm:$0xff]
  %v527 = vld [vmem:[#allocation2 + $0x21] sm:$0xff]
  %v528 = vperm.slane %v444, 6
  %v529 = vmul.f32 %v526, %v528
  %v530 = vmul.f32 %v527, %v528
  %v531 = vadd.f32 %v524, %v529
  %v532 = vadd.f32 %v525, %v530
  %v533 = vperm.slane %v444, 7
  %535 = vrot.lane.b32.xlu0 %v533, 8
  %v536 = vpop.permute.xlu0 %535
  %v538 = vmul.f32 %v526, %v536
  %v539 = vmul.f32 %v527, %v536
  %542 = vrot.lane.b32.xlu0 %v538, 120
  %v543 = vpop.permute.xlu0 %542
  %544 = vrot.lane.b32.xlu0 %v539, 120
  %v545 = vpop.permute.xlu0 %544
  %v548 = vadd.f32 %v531, %v543
  %v549 = vadd.f32 %v532, %v545
  %v550 = vperm.slane %v445, 0
  %552 = vrot.lane.b32.xlu0 %v550, 16
  %v553 = vpop.permute.xlu0 %552
  %v555 = vmul.f32 %v526, %v553
  %v556 = vmul.f32 %v527, %v553
  %559 = vrot.lane.b32.xlu0 %v555, 112
  %v560 = vpop.permute.xlu0 %559
  %561 = vrot.lane.b32.xlu0 %v556, 112
  %v562 = vpop.permute.xlu0 %561
  %v565 = vadd.f32 %v548, %v560
  %v566 = vadd.f32 %v549, %v562
  %569 = vrot.lane.b32.xlu0 %v565, 120
  %v570 = vpop.permute.xlu0 %569
  %571 = vrot.lane.b32.xlu0 %v566, 120
  %v572 = vpop.permute.xlu0 %571
  %575 = vrot.lane.b32.xlu0 %v565, 112
  %v576 = vpop.permute.xlu0 %575
  %577 = vrot.lane.b32.xlu0 %v566, 112
  %v578 = vpop.permute.xlu0 %577
  %581 = vrot.lane.b32.xlu0 %v565, 104
  %v582 = vpop.permute.xlu0 %581
  %583 = vrot.lane.b32.xlu0 %v566, 104
  %v584 = vpop.permute.xlu0 %583
  %587 = vrot.lane.b32.xlu0 %v565, 96
  %v588 = vpop.permute.xlu0 %587
  %589 = vrot.lane.b32.xlu0 %v566, 96
  %v590 = vpop.permute.xlu0 %589
  %593 = vrot.lane.b32.xlu0 %v565, 88
  %v594 = vpop.permute.xlu0 %593
  %595 = vrot.lane.b32.xlu0 %v566, 88
  %v596 = vpop.permute.xlu0 %595
  %599 = vrot.lane.b32.xlu0 %v565, 80
  %v600 = vpop.permute.xlu0 %599
  %601 = vrot.lane.b32.xlu0 %v566, 80
  %v602 = vpop.permute.xlu0 %601
  %605 = vrot.lane.b32.xlu0 %v565, 72
  %v606 = vpop.permute.xlu0 %605
  %607 = vrot.lane.b32.xlu0 %v566, 72
  %v608 = vpop.permute.xlu0 %607
  %v611 = vld [vmem:[%s5] sm:$0x1]
  %v612 = vld [vmem:[%s6] sm:$0x1]
  %v613 = vsel %vm171, %v565, 0.0
  %v614 = vsel %vm171, %v566, 0.0
  %v615 = vadd.f32 %v613, %v614
  %v616 = vsel %vm171, %v570, 0.0
  %v617 = vadd.f32 %v615, %v616
  %v618 = vsel %vm171, %v572, 0.0
  %v619 = vadd.f32 %v617, %v618
  %v620 = vsel %vm171, %v576, 0.0
  %v621 = vadd.f32 %v619, %v620
  %v622 = vsel %vm171, %v578, 0.0
  %v623 = vadd.f32 %v621, %v622
  %v624 = vsel %vm171, %v582, 0.0
  %v625 = vadd.f32 %v623, %v624
  %v626 = vsel %vm171, %v584, 0.0
  %v627 = vadd.f32 %v625, %v626
  %v628 = vsel %vm171, %v588, 0.0
  %v629 = vadd.f32 %v627, %v628
  %v630 = vsel %vm171, %v590, 0.0
  %v631 = vadd.f32 %v629, %v630
  %v632 = vsel %vm171, %v594, 0.0
  %v633 = vadd.f32 %v631, %v632
  %v634 = vsel %vm171, %v596, 0.0
  %v635 = vadd.f32 %v633, %v634
  %v636 = vsel %vm171, %v600, 0.0
  %v637 = vadd.f32 %v635, %v636
  %v638 = vsel %vm171, %v602, 0.0
  %v639 = vadd.f32 %v637, %v638
  %v640 = vsel %vm171, %v606, 0.0
  %v641 = vadd.f32 %v639, %v640
  %v642 = vsel %vm171, %v608, 0.0
  %v643 = vadd.f32 %v641, %v642
  %v644 = vrot.slane %v643, 4
  %v645 = vadd.f32 %v643, %v644
  %v646 = vrot.slane %v645, 2
  %v647 = vadd.f32 %v645, %v646
  %v648 = vrot.slane %v647, 1
  %v649 = vadd.f32 %v647, %v648
  %v650 = vmul.f32 %v649, 0.0078125
  %v651 = vsub.f32 %v565, %v650
  %v652 = vsub.f32 %v566, %v650
  %v653 = vsub.f32 %v570, %v650
  %v654 = vsub.f32 %v572, %v650
  %v655 = vsub.f32 %v576, %v650
  %v656 = vsub.f32 %v578, %v650
  %v657 = vsub.f32 %v582, %v650
  %v658 = vsub.f32 %v584, %v650
  %v659 = vsub.f32 %v588, %v650
  %v660 = vsub.f32 %v590, %v650
  %v661 = vsub.f32 %v594, %v650
  %v662 = vsub.f32 %v596, %v650
  %v663 = vsub.f32 %v600, %v650
  %v664 = vsub.f32 %v602, %v650
  %v665 = vsub.f32 %v606, %v650
  %v666 = vsub.f32 %v608, %v650
  %v667 = vmul.f32 %v651, %v651
  %v668 = vmul.f32 %v652, %v652
  %v669 = vmul.f32 %v653, %v653
  %v670 = vmul.f32 %v654, %v654
  %v671 = vmul.f32 %v655, %v655
  %v672 = vmul.f32 %v656, %v656
  %v673 = vmul.f32 %v657, %v657
  %v674 = vmul.f32 %v658, %v658
  %v675 = vmul.f32 %v659, %v659
  %v676 = vmul.f32 %v660, %v660
  %v677 = vmul.f32 %v661, %v661
  %v678 = vmul.f32 %v662, %v662
  %v679 = vmul.f32 %v663, %v663
  %v680 = vmul.f32 %v664, %v664
  %v681 = vmul.f32 %v665, %v665
  %v682 = vmul.f32 %v666, %v666
  %v683 = vsel %vm171, %v667, 0.0
  %v684 = vsel %vm171, %v668, 0.0
  %v685 = vadd.f32 %v683, %v684
  %v686 = vsel %vm171, %v669, 0.0
  %v687 = vadd.f32 %v685, %v686
  %v688 = vsel %vm171, %v670, 0.0
  %v689 = vadd.f32 %v687, %v688
  %v690 = vsel %vm171, %v671, 0.0
  %v691 = vadd.f32 %v689, %v690
  %v692 = vsel %vm171, %v672, 0.0
  %v693 = vadd.f32 %v691, %v692
  %v694 = vsel %vm171, %v673, 0.0
  %v695 = vadd.f32 %v693, %v694
  %v696 = vsel %vm171, %v674, 0.0
  %v697 = vadd.f32 %v695, %v696
  %v698 = vsel %vm171, %v675, 0.0
  %v699 = vadd.f32 %v697, %v698
  %v700 = vsel %vm171, %v676, 0.0
  %v701 = vadd.f32 %v699, %v700
  %v702 = vsel %vm171, %v677, 0.0
  %v703 = vadd.f32 %v701, %v702
  %v704 = vsel %vm171, %v678, 0.0
  %v705 = vadd.f32 %v703, %v704
  %v706 = vsel %vm171, %v679, 0.0
  %v707 = vadd.f32 %v705, %v706
  %v708 = vsel %vm171, %v680, 0.0
  %v709 = vadd.f32 %v707, %v708
  %v710 = vsel %vm171, %v681, 0.0
  %v711 = vadd.f32 %v709, %v710
  %v712 = vsel %vm171, %v682, 0.0
  %v713 = vadd.f32 %v711, %v712
  %v714 = vrot.slane %v713, 4
  %v715 = vadd.f32 %v713, %v714
  %v716 = vrot.slane %v715, 2
  %v717 = vadd.f32 %v715, %v716
  %v718 = vrot.slane %v717, 1
  %v719 = vadd.f32 %v717, %v718
  %v720 = vmul.f32 %v719, 0.0078125
  %v721 = vadd.f32 %v720, 1e-05
  %v722 = vrsqrt.pop %v721
  %v723 = vmul.f32 %v722, %v721
  %v724 = vmul.f32 %v723, %v722
  %v725 = vmul.f32 0.5, %v724
  %v726 = vsub.f32 1.5, %v725
  %v727 = vmul.f32 %v722, %v726
  %vm728 = vweird.f32 %v721
  %vm729 = vweird.f32 %v722
  %vm730 = vmor %vm728, %vm729
  %v731 = vsel %vm730, %v722, %v727
  %v732 = vmul.f32 %v611, %v731
  %v734 = vperm.slane %v732, 0
  %v736 = vmul.f32 %v651, %v734
  %v737 = vmul.f32 %v652, %v734
  %v738 = vmul.f32 %v653, %v734
  %v739 = vmul.f32 %v654, %v734
  %v740 = vmul.f32 %v655, %v734
  %v741 = vmul.f32 %v656, %v734
  %v742 = vmul.f32 %v657, %v734
  %v743 = vmul.f32 %v658, %v734
  %v744 = vmul.f32 %v659, %v734
  %v745 = vmul.f32 %v660, %v734
  %v746 = vmul.f32 %v661, %v734
  %v747 = vmul.f32 %v662, %v734
  %v748 = vmul.f32 %v663, %v734
  %v749 = vmul.f32 %v664, %v734
  %v750 = vmul.f32 %v665, %v734
  %v751 = vmul.f32 %v666, %v734
  %v753 = vperm.slane %v612, 0
  %v755 = vadd.f32 %v736, %v753
  %v756 = vadd.f32 %v737, %v753
  %v757 = vadd.f32 %v738, %v753
  %v758 = vadd.f32 %v739, %v753
  %v759 = vadd.f32 %v740, %v753
  %v760 = vadd.f32 %v741, %v753
  %v761 = vadd.f32 %v742, %v753
  %v762 = vadd.f32 %v743, %v753
  %v763 = vadd.f32 %v744, %v753
  %v764 = vadd.f32 %v745, %v753
  %v765 = vadd.f32 %v746, %v753
  %v766 = vadd.f32 %v747, %v753
  %v767 = vadd.f32 %v748, %v753
  %v768 = vadd.f32 %v749, %v753
  %v769 = vadd.f32 %v750, %v753
  %v770 = vadd.f32 %v751, %v753
  %v771 = vmax.f32 %v755, 0.0
  %v772 = vmax.f32 %v756, 0.0
  %v773 = vmax.f32 %v757, 0.0
  %v774 = vmax.f32 %v758, 0.0
  %v775 = vmax.f32 %v759, 0.0
  %v776 = vmax.f32 %v760, 0.0
  %v777 = vmax.f32 %v761, 0.0
  %v778 = vmax.f32 %v762, 0.0
  %v779 = vmax.f32 %v763, 0.0
  %v780 = vmax.f32 %v764, 0.0
  %v781 = vmax.f32 %v765, 0.0
  %v782 = vmax.f32 %v766, 0.0
  %v783 = vmax.f32 %v767, 0.0
  %v784 = vmax.f32 %v768, 0.0
  %v785 = vmax.f32 %v769, 0.0
  %v786 = vmax.f32 %v770, 0.0
  %v787 = vld [vmem:[%s7] sm:$0xff]
  %v789 = vsel %vm171, %v771, 0
  %v792 = vsel %vm171, %v772, 0
  %v795 = vsel %vm171, %v773, 0
  %v798 = vsel %vm171, %v774, 0
  %v801 = vsel %vm171, %v775, 0
  %v804 = vsel %vm171, %v776, 0
  %v807 = vsel %vm171, %v777, 0
  %v810 = vsel %vm171, %v778, 0
  %v813 = vsel %vm171, %v779, 0
  %v816 = vsel %vm171, %v780, 0
  %v819 = vsel %vm171, %v781, 0
  %v822 = vsel %vm171, %v782, 0
  %v825 = vsel %vm171, %v783, 0
  %v828 = vsel %vm171, %v784, 0
  %v831 = vsel %vm171, %v785, 0
  %v834 = vsel %vm171, %v786, 0
  %836 = vmatpush.msra.mxu0 0.0
  %837 = vmatpush.msra.mxu0 0.0
  %838 = vmatpush.msra.mxu0 0.0
  %839 = vmatpush.msra.mxu0 0.0
  %840 = vmatpush.msra.mxu0 0.0
  %841 = vmatpush.msra.mxu0 0.0
  %842 = vmatpush.msra.mxu0 0.0
  %843 = vmatpush.msra.mxu0 0.0
  %844 = vmatpush.msra.mxu0 0.0
  %845 = vmatpush.msra.mxu0 0.0
  %846 = vmatpush.msra.mxu0 0.0
  %847 = vmatpush.msra.mxu0 0.0
  %848 = vmatpush.msra.mxu0 0.0
  %849 = vmatpush.msra.mxu0 0.0
  %850 = vmatpush.msra.mxu0 0.0
  %851 = vmatpush.msra.mxu0 %v787
  %852 = vmatmul.f32.gmra.mxu0 %v789
  %v853 = vpop.f32.mrf.mxu0
  %v854 = vadd.f32 0.0, %v853
  %855 = vmatmul.f32.gmra.mxu0 %v792
  %v856 = vpop.f32.mrf.mxu0
  %v857 = vadd.f32 0.0, %v856
  %858 = vmatmul.f32.gmra.mxu0 %v795
  %v859 = vpop.f32.mrf.mxu0
  %v860 = vadd.f32 0.0, %v859
  %861 = vmatmul.f32.gmra.mxu0 %v798
  %v862 = vpop.f32.mrf.mxu0
  %v863 = vadd.f32 0.0, %v862
  %864 = vmatmul.f32.gmra.mxu0 %v801
  %v865 = vpop.f32.mrf.mxu0
  %v866 = vadd.f32 0.0, %v865
  %867 = vmatmul.f32.gmra.mxu0 %v804
  %v868 = vpop.f32.mrf.mxu0
  %v869 = vadd.f32 0.0, %v868
  %870 = vmatmul.f32.gmra.mxu0 %v807
  %v871 = vpop.f32.mrf.mxu0
  %v872 = vadd.f32 0.0, %v871
  %873 = vmatmul.f32.gmra.mxu0 %v810
  %v874 = vpop.f32.mrf.mxu0
  %v875 = vadd.f32 0.0, %v874
  %876 = vmatmul.f32.gmra.mxu0 %v813
  %v877 = vpop.f32.mrf.mxu0
  %v878 = vadd.f32 0.0, %v877
  %879 = vmatmul.f32.gmra.mxu0 %v816
  %v880 = vpop.f32.mrf.mxu0
  %v881 = vadd.f32 0.0, %v880
  %882 = vmatmul.f32.gmra.mxu0 %v819
  %v883 = vpop.f32.mrf.mxu0
  %v884 = vadd.f32 0.0, %v883
  %885 = vmatmul.f32.gmra.mxu0 %v822
  %v886 = vpop.f32.mrf.mxu0
  %v887 = vadd.f32 0.0, %v886
  %888 = vmatmul.f32.gmra.mxu0 %v825
  %v889 = vpop.f32.mrf.mxu0
  %v890 = vadd.f32 0.0, %v889
  %891 = vmatmul.f32.gmra.mxu0 %v828
  %v892 = vpop.f32.mrf.mxu0
  %v893 = vadd.f32 0.0, %v892
  %894 = vmatmul.f32.gmra.mxu0 %v831
  %v895 = vpop.f32.mrf.mxu0
  %v896 = vadd.f32 0.0, %v895
  %897 = vmatmul.f32.gmra.mxu0 %v834
  %v898 = vpop.f32.mrf.mxu0
  %v899 = vadd.f32 0.0, %v898
  %900 = vdwg.mxu0
  %v901 = vld [vmem:[%s8] sm:$0x1]
  %v902 = vld [vmem:[%s9] sm:$0x1]
  %v903 = vsel %vm55, %v854, 0.0
  %v904 = vsel %vm55, %v857, 0.0
  %v905 = vadd.f32 %v903, %v904
  %v906 = vsel %vm55, %v860, 0.0
  %v907 = vadd.f32 %v905, %v906
  %v908 = vsel %vm55, %v863, 0.0
  %v909 = vadd.f32 %v907, %v908
  %v910 = vsel %vm55, %v866, 0.0
  %v911 = vadd.f32 %v909, %v910
  %v912 = vsel %vm55, %v869, 0.0
  %v913 = vadd.f32 %v911, %v912
  %v914 = vsel %vm55, %v872, 0.0
  %v915 = vadd.f32 %v913, %v914
  %v916 = vsel %vm55, %v875, 0.0
  %v917 = vadd.f32 %v915, %v916
  %v918 = vsel %vm55, %v878, 0.0
  %v919 = vadd.f32 %v917, %v918
  %v920 = vsel %vm55, %v881, 0.0
  %v921 = vadd.f32 %v919, %v920
  %v922 = vsel %vm55, %v884, 0.0
  %v923 = vadd.f32 %v921, %v922
  %v924 = vsel %vm55, %v887, 0.0
  %v925 = vadd.f32 %v923, %v924
  %v926 = vsel %vm55, %v890, 0.0
  %v927 = vadd.f32 %v925, %v926
  %v928 = vsel %vm55, %v893, 0.0
  %v929 = vadd.f32 %v927, %v928
  %v930 = vsel %vm55, %v896, 0.0
  %v931 = vadd.f32 %v929, %v930
  %v932 = vsel %vm55, %v899, 0.0
  %v933 = vadd.f32 %v931, %v932
  %v934 = vrot.slane %v933, 4
  %v935 = vadd.f32 %v933, %v934
  %v936 = vrot.slane %v935, 2
  %v937 = vadd.f32 %v935, %v936
  %v938 = vrot.slane %v937, 1
  %v939 = vadd.f32 %v937, %v938
  %v940 = vmul.f32 %v939, 0.0078125
  %v941 = vsub.f32 %v854, %v940
  %v942 = vsub.f32 %v857, %v940
  %v943 = vsub.f32 %v860, %v940
  %v944 = vsub.f32 %v863, %v940
  %v945 = vsub.f32 %v866, %v940
  %v946 = vsub.f32 %v869, %v940
  %v947 = vsub.f32 %v872, %v940
  %v948 = vsub.f32 %v875, %v940
  %v949 = vsub.f32 %v878, %v940
  %v950 = vsub.f32 %v881, %v940
  %v951 = vsub.f32 %v884, %v940
  %v952 = vsub.f32 %v887, %v940
  %v953 = vsub.f32 %v890, %v940
  %v954 = vsub.f32 %v893, %v940
  %v955 = vsub.f32 %v896, %v940
  %v956 = vsub.f32 %v899, %v940
  %v957 = vmul.f32 %v941, %v941
  %v958 = vmul.f32 %v942, %v942
  %v959 = vmul.f32 %v943, %v943
  %v960 = vmul.f32 %v944, %v944
  %v961 = vmul.f32 %v945, %v945
  %v962 = vmul.f32 %v946, %v946
  %v963 = vmul.f32 %v947, %v947
  %v964 = vmul.f32 %v948, %v948
  %v965 = vmul.f32 %v949, %v949
  %v966 = vmul.f32 %v950, %v950
  %v967 = vmul.f32 %v951, %v951
  %v968 = vmul.f32 %v952, %v952
  %v969 = vmul.f32 %v953, %v953
  %v970 = vmul.f32 %v954, %v954
  %v971 = vmul.f32 %v955, %v955
  %v972 = vmul.f32 %v956, %v956
  %v973 = vsel %vm55, %v957, 0.0
  %v974 = vsel %vm55, %v958, 0.0
  %v975 = vadd.f32 %v973, %v974
  %v976 = vsel %vm55, %v959, 0.0
  %v977 = vadd.f32 %v975, %v976
  %v978 = vsel %vm55, %v960, 0.0
  %v979 = vadd.f32 %v977, %v978
  %v980 = vsel %vm55, %v961, 0.0
  %v981 = vadd.f32 %v979, %v980
  %v982 = vsel %vm55, %v962, 0.0
  %v983 = vadd.f32 %v981, %v982
  %v984 = vsel %vm55, %v963, 0.0
  %v985 = vadd.f32 %v983, %v984
  %v986 = vsel %vm55, %v964, 0.0
  %v987 = vadd.f32 %v985, %v986
  %v988 = vsel %vm55, %v965, 0.0
  %v989 = vadd.f32 %v987, %v988
  %v990 = vsel %vm55, %v966, 0.0
  %v991 = vadd.f32 %v989, %v990
  %v992 = vsel %vm55, %v967, 0.0
  %v993 = vadd.f32 %v991, %v992
  %v994 = vsel %vm55, %v968, 0.0
  %v995 = vadd.f32 %v993, %v994
  %v996 = vsel %vm55, %v969, 0.0
  %v997 = vadd.f32 %v995, %v996
  %v998 = vsel %vm55, %v970, 0.0
  %v999 = vadd.f32 %v997, %v998
  %v1000 = vsel %vm55, %v971, 0.0
  %v1001 = vadd.f32 %v999, %v1000
  %v1002 = vsel %vm55, %v972, 0.0
  %v1003 = vadd.f32 %v1001, %v1002
  %v1004 = vrot.slane %v1003, 4
  %v1005 = vadd.f32 %v1003, %v1004
  %v1006 = vrot.slane %v1005, 2
  %v1007 = vadd.f32 %v1005, %v1006
  %v1008 = vrot.slane %v1007, 1
  %v1009 = vadd.f32 %v1007, %v1008
  %v1010 = vmul.f32 %v1009, 0.0078125
  %v1011 = vadd.f32 %v1010, 1e-05
  %v1012 = vrsqrt.pop %v1011
  %v1013 = vmul.f32 %v1012, %v1011
  %v1014 = vmul.f32 %v1013, %v1012
  %v1015 = vmul.f32 0.5, %v1014
  %v1016 = vsub.f32 1.5, %v1015
  %v1017 = vmul.f32 %v1012, %v1016
  %vm1018 = vweird.f32 %v1011
  %vm1019 = vweird.f32 %v1012
  %vm1020 = vmor %vm1018, %vm1019
  %v1021 = vsel %vm1020, %v1012, %v1017
  %v1022 = vmul.f32 %v901, %v1021
  %v1024 = vperm.slane %v1022, 0
  %v1026 = vmul.f32 %v941, %v1024
  %v1027 = vmul.f32 %v942, %v1024
  %v1028 = vmul.f32 %v943, %v1024
  %v1029 = vmul.f32 %v944, %v1024
  %v1030 = vmul.f32 %v945, %v1024
  %v1031 = vmul.f32 %v946, %v1024
  %v1032 = vmul.f32 %v947, %v1024
  %v1033 = vmul.f32 %v948, %v1024
  %v1034 = vmul.f32 %v949, %v1024
  %v1035 = vmul.f32 %v950, %v1024
  %v1036 = vmul.f32 %v951, %v1024
  %v1037 = vmul.f32 %v952, %v1024
  %v1038 = vmul.f32 %v953, %v1024
  %v1039 = vmul.f32 %v954, %v1024
  %v1040 = vmul.f32 %v955, %v1024
  %v1041 = vmul.f32 %v956, %v1024
  %v1043 = vperm.slane %v902, 0
  %v1045 = vadd.f32 %v1026, %v1043
  %v1046 = vadd.f32 %v1027, %v1043
  %v1047 = vadd.f32 %v1028, %v1043
  %v1048 = vadd.f32 %v1029, %v1043
  %v1049 = vadd.f32 %v1030, %v1043
  %v1050 = vadd.f32 %v1031, %v1043
  %v1051 = vadd.f32 %v1032, %v1043
  %v1052 = vadd.f32 %v1033, %v1043
  %v1053 = vadd.f32 %v1034, %v1043
  %v1054 = vadd.f32 %v1035, %v1043
  %v1055 = vadd.f32 %v1036, %v1043
  %v1056 = vadd.f32 %v1037, %v1043
  %v1057 = vadd.f32 %v1038, %v1043
  %v1058 = vadd.f32 %v1039, %v1043
  %v1059 = vadd.f32 %v1040, %v1043
  %v1060 = vadd.f32 %v1041, %v1043
  %v1061 = vadd.f32 %v1045, %v35
  %v1062 = vadd.f32 %v1046, %v36
  %v1063 = vadd.f32 %v1047, %v37
  %v1064 = vadd.f32 %v1048, %v38
  %v1065 = vadd.f32 %v1049, %v39
  %v1066 = vadd.f32 %v1050, %v40
  %v1067 = vadd.f32 %v1051, %v41
  %v1068 = vadd.f32 %v1052, %v42
  %v1069 = vadd.f32 %v1053, %v43
  %v1070 = vadd.f32 %v1054, %v44
  %v1071 = vadd.f32 %v1055, %v45
  %v1072 = vadd.f32 %v1056, %v46
  %v1073 = vadd.f32 %v1057, %v47
  %v1074 = vadd.f32 %v1058, %v48
  %v1075 = vadd.f32 %v1059, %v49
  %v1076 = vadd.f32 %v1060, %v50
  %v1077 = vmax.f32 %v1061, 0.0
  %v1078 = vmax.f32 %v1062, 0.0
  %v1079 = vmax.f32 %v1063, 0.0
  %v1080 = vmax.f32 %v1064, 0.0
  %v1081 = vmax.f32 %v1065, 0.0
  %v1082 = vmax.f32 %v1066, 0.0
  %v1083 = vmax.f32 %v1067, 0.0
  %v1084 = vmax.f32 %v1068, 0.0
  %v1085 = vmax.f32 %v1069, 0.0
  %v1086 = vmax.f32 %v1070, 0.0
  %v1087 = vmax.f32 %v1071, 0.0
  %v1088 = vmax.f32 %v1072, 0.0
  %v1089 = vmax.f32 %v1073, 0.0
  %v1090 = vmax.f32 %v1074, 0.0
  %v1091 = vmax.f32 %v1075, 0.0
  %v1092 = vmax.f32 %v1076, 0.0
  %1093 = vst.msk [vmem:[%s10] sm:$0xff] %vm55, %v1077
  %1094 = vst.msk [vmem:[%s10 + $0x8] sm:$0xff] %vm55, %v1078
  %1095 = vst.msk [vmem:[%s10 + $0x10] sm:$0xff] %vm55, %v1079
  %1096 = vst.msk [vmem:[%s10 + $0x18] sm:$0xff] %vm55, %v1080
  %1097 = vst.msk [vmem:[%s10 + $0x20] sm:$0xff] %vm55, %v1081
  %1098 = vst.msk [vmem:[%s10 + $0x28] sm:$0xff] %vm55, %v1082
  %1099 = vst.msk [vmem:[%s10 + $0x30] sm:$0xff] %vm55, %v1083
  %1100 = vst.msk [vmem:[%s10 + $0x38] sm:$0xff] %vm55, %v1084
  %1101 = vst.msk [vmem:[%s10 + $0x40] sm:$0xff] %vm55, %v1085
  %1102 = vst.msk [vmem:[%s10 + $0x48] sm:$0xff] %vm55, %v1086
  %1103 = vst.msk [vmem:[%s10 + $0x50] sm:$0xff] %vm55, %v1087
  %1104 = vst.msk [vmem:[%s10 + $0x58] sm:$0xff] %vm55, %v1088
  %1105 = vst.msk [vmem:[%s10 + $0x60] sm:$0xff] %vm55, %v1089
  %1106 = vst.msk [vmem:[%s10 + $0x68] sm:$0xff] %vm55, %v1090
  %1107 = vst.msk [vmem:[%s10 + $0x70] sm:$0xff] %vm55, %v1091
  %1108 = vst.msk [vmem:[%s10 + $0x78] sm:$0xff] %vm55, %v1092
  // Predicated region
  $region42: #{tpu_custom_call.1} parent=0 // pred_check
    _
  $region43: #{tpu_custom_call.1} parent=0 // pred_check_branch
    %1110 = sbr.rel (0) target = $region45
  $region44: #{tpu_custom_call.1} parent=0 // pred_region
    _
  $region45: #{tpu_custom_call.1} parent=0 // pred_fallthru
    _
  // Predicated region
  $region46: #{tpu_custom_call.1} parent=0 // pred_check
    _
  $region47: #{tpu_custom_call.1} parent=0 // pred_check_branch
    %1112 = sbr.rel (0) target = $region49
  $region48: #{tpu_custom_call.1} parent=0 // pred_region
    _
  $region49: #{tpu_custom_call.1} parent=0 // pred_fallthru
    _

</llo_original>
